<compile_context>
chip_gen: v6e
topology: v6e:2x2x1
jax: 0.10.0
libtpu: 0.0.40
codegen_flags: <defaults>
</compile_context>

<pallas_src>
import functools

import jax
import jax.numpy as jnp
from jax.experimental import pallas as pl
from jax.experimental.pallas import tpu as pltpu


# --------------------- fused multi-head attention kernel --------------------
def _mha_fused_kernel(x_ref, wqkv_ref, wproj_ref, b_ref, o_ref, *,
                      num_heads, head_size, compute_dtype):
    # x_ref:    (1, T, C)        current batch element
    # wqkv_ref: (C, 3*H*hs)      fused [Q | K | V] weights (scale folded into Q)
    # wproj_ref:(H*hs, C)        output projection weight
    # b_ref:    (1, C)           output projection bias (f32)
    # o_ref:    (1, T, C)        final projected output (lane-dense, C >= 128)
    H, hs = num_heads, head_size
    Hhs = H * hs

    x = x_ref[0]                                   # (T, C) float32
    T = x.shape[0]
    xb = x.astype(compute_dtype)

    # Single fused QKV projection on the MXU, f32 accumulation, then one cast
    # back to the MXU compute dtype for the attention matmuls.
    qkv = jnp.dot(xb, wqkv_ref[...], preferred_element_type=jnp.float32)
    qkv_b = qkv.astype(compute_dtype)              # one (T, 3*H*hs) cast
    q = qkv_b[:, 0 * Hhs:1 * Hhs]                  # (T, H*hs), scale pre-folded
    k = qkv_b[:, 1 * Hhs:2 * Hhs]
    v = qkv_b[:, 2 * Hhs:3 * Hhs]

    # Causal mask, built once (hoisted out of the per-head loop).
    row = jax.lax.broadcasted_iota(jnp.int32, (T, T), 0)
    col = jax.lax.broadcasted_iota(jnp.int32, (T, T), 1)
    causal = col <= row
    neg = jnp.float32(-1e30)   # large finite negative (NaN-safe vs -inf)

    outs = []
    for h in range(H):          # H is small & static -> unrolled at trace time
        qh = q[:, h * hs:(h + 1) * hs]             # (T, hs) bf16
        kh = k[:, h * hs:(h + 1) * hs]
        vh = v[:, h * hs:(h + 1) * hs]

        # scores: contract the head dim of q and k directly (no explicit k.T)
        s = jax.lax.dot_general(qh, kh, (((1,), (1,)), ((), ())),
                                preferred_element_type=jnp.float32)   # (T, T)
        s = jnp.where(causal, s, neg)

        # numerically stable softmax, all f32 (VPU/EUP).  Normalization is
        # applied AFTER the P@V matmul (cheaper: (T, hs) vs (T, T) multiplies).
        m = jnp.max(s, axis=-1, keepdims=True)
        p = jnp.exp(s - m)                                            # (T, T)
        denom = jnp.sum(p, axis=-1, keepdims=True)                    # (T, 1)
        inv_denom = pl.reciprocal(denom, approx=True)

        # attention-weight dropout: identity in eval mode
        ov = jnp.dot(p.astype(compute_dtype), vh,
                     preferred_element_type=jnp.float32)              # (T, hs)
        outs.append(ov * inv_denom)

    concat = jnp.concatenate(outs, axis=-1)                           # (T, H*hs)

    # Fused output projection + bias (output dropout: identity in eval mode).
    y = jnp.dot(concat.astype(compute_dtype), wproj_ref[...],
                preferred_element_type=jnp.float32)
    y = y + b_ref[...]                                                # (1, C) bcast
    o_ref[0] = y.astype(o_ref.dtype)


# ---------------------------------- wrapper ----------------------------------
def multi_head_attention(x, wq, wk, wv, w_proj, b_proj,
                         compute_dtype=jnp.bfloat16):
    """
    x:        (B, T, C) float32
    wq/wk/wv: (H, C, hs)  per-head projection weights (no bias)
    w_proj:   (H*hs, C)   output projection weight (transposed vs torch Linear)
    b_proj:   (C,)        output projection bias
    returns   (B, T, C)
    """
    B, T, C = x.shape
    H, _, hs = wq.shape
    Hhs = H * hs

    # One-time parameter prep (outside the kernel hot path):
    #  * stack per-head weights as (C, H*hs): head h owns lanes [h*hs, (h+1)*hs)
    #  * fold the 1/sqrt(hs) attention scale into the Q weight
    #  * fuse Q/K/V into one (C, 3*H*hs) weight  -> single MXU matmul in-kernel
    #  * cast matmul weights to compute_dtype (bf16); f32 accumulation in-kernel
    scale = hs ** -0.5
    wq_f = jnp.transpose(wq, (1, 0, 2)).reshape(C, Hhs) * scale
    wk_f = jnp.transpose(wk, (1, 0, 2)).reshape(C, Hhs)
    wv_f = jnp.transpose(wv, (1, 0, 2)).reshape(C, Hhs)
    w_qkv = jnp.concatenate([wq_f, wk_f, wv_f], axis=-1).astype(compute_dtype)
    w_p = w_proj.astype(compute_dtype)
    b_p = b_proj.reshape(1, C).astype(jnp.float32)

    kernel = functools.partial(_mha_fused_kernel, num_heads=H, head_size=hs,
                               compute_dtype=compute_dtype)
    return pl.pallas_call(
        kernel,
        out_shape=jax.ShapeDtypeStruct((B, T, C), x.dtype),
        grid=(B,),
        in_specs=[
            pl.BlockSpec((1, T, C), lambda b: (b, 0, 0)),      # x
            pl.BlockSpec((C, 3 * Hhs), lambda b: (0, 0)),      # fused QKV weight
            pl.BlockSpec((Hhs, C), lambda b: (0, 0)),          # proj weight
            pl.BlockSpec((1, C), lambda b: (0, 0)),            # proj bias
        ],
        out_specs=pl.BlockSpec((1, T, C), lambda b: (b, 0, 0)),
        compiler_params=pltpu.CompilerParams(
            dimension_semantics=("parallel",)),
    )(x, w_qkv, w_p, b_p)


# --------------------------------- reference ----------------------------------
def _reference(x, wq, wk, wv, w_proj, b_proj, compute_dtype=jnp.bfloat16):
    """Pure-JAX reference mirroring the kernel's dtype policy
    (bf16 matmul inputs, f32 accumulation, f32 softmax)."""
    B, T, C = x.shape
    H, _, hs = wq.shape
    cd = compute_dtype
    xb = x.astype(cd)
    scale = hs ** -0.5
    mask = jnp.tril(jnp.ones((T, T), dtype=bool))
    outs = []
    for h in range(H):
        q = jnp.dot(xb, (wq[h] * scale).astype(cd),
                    preferred_element_type=jnp.float32)
        k = jnp.dot(xb, wk[h].astype(cd), preferred_element_type=jnp.float32)
        v = jnp.dot(xb, wv[h].astype(cd), preferred_element_type=jnp.float32)
        s = jnp.einsum('btd,bsd->bts', q.astype(cd), k.astype(cd),
                       preferred_element_type=jnp.float32)
        s = jnp.where(mask, s, -1e30)
        p = jax.nn.softmax(s, axis=-1)
        outs.append(jnp.einsum('bts,bsd->btd', p.astype(cd), v.astype(cd),
                               preferred_element_type=jnp.float32))
    cat = jnp.concatenate(outs, axis=-1)
    return jnp.dot(cat.astype(cd), w_proj.astype(cd),
                   preferred_element_type=jnp.float32) + b_proj


# ------------------------------------ main -------------------------------------
if __name__ == "__main__":
    # Small shapes consistent with the module structure (NewsGPT block_size=64
    # sequence, n_embd channels, n_head heads, head_size = n_embd // n_head),
    # scaled down but TPU-friendly: C = 128 lanes (lane-dense output), H*hs = C.
    B, T, C = 2, 64, 128
    H = 4
    hs = C // H

    key = jax.random.PRNGKey(0)
    ks = jax.random.split(key, 6)
    x = jax.random.normal(ks[0], (B, T, C), dtype=jnp.float32)
    wq = jax.random.normal(ks[1], (H, C, hs), dtype=jnp.float32) * 0.02
    wk = jax.random.normal(ks[2], (H, C, hs), dtype=jnp.float32) * 0.02
    wv = jax.random.normal(ks[3], (H, C, hs), dtype=jnp.float32) * 0.02
    w_proj = jax.random.normal(ks[4], (H * hs, C), dtype=jnp.float32) * 0.02
    b_proj = jax.random.normal(ks[5], (C,), dtype=jnp.float32) * 0.02

    out = multi_head_attention(x, wq, wk, wv, w_proj, b_proj)
    out = jax.block_until_ready(out)

    ref = _reference(x, wq, wk, wv, w_proj, b_proj)
    assert out.shape == (B, T, C)
    max_err = float(jnp.max(jnp.abs(out - ref)))
    assert jnp.allclose(out, ref, atol=3e-3, rtol=2e-2), \
        f"mismatch vs reference, max abs err={max_err}"

    print("KERNEL_OK")
</pallas_src>

<mosaic_0001>
module attributes {stable_mosaic.version = 11 : i64} {
  func.func @_mha_fused_kernel(%arg0: i32, %arg1: memref<1x64x128xf32, #tpu.memory_space<vmem>>, %arg2: memref<128x384xbf16, #tpu.memory_space<vmem>>, %arg3: memref<128x128xbf16, #tpu.memory_space<vmem>>, %arg4: memref<1x128xf32, #tpu.memory_space<vmem>>, %arg5: memref<1x64x128xf32, #tpu.memory_space<vmem>>) attributes {dimension_semantics = [#tpu.dimension_semantics<parallel>], iteration_bounds = array<i64: 2>, scalar_prefetch = 0 : i64, scratch_operands = 0 : i64, tpu.core_type = #tpu.core_type<tc>, window_params = [{transform_indices = @transform_0, window_bounds = array<i64: 1, 64, 128>}, {pipeline_mode = #tpu.pipeline_mode<synchronous>, transform_indices = @transform_1, window_bounds = array<i64: 128, 384>}, {pipeline_mode = #tpu.pipeline_mode<synchronous>, transform_indices = @transform_2, window_bounds = array<i64: 128, 128>}, {pipeline_mode = #tpu.pipeline_mode<synchronous>, transform_indices = @transform_3, window_bounds = array<i64: 1, 128>}, {transform_indices = @transform_4, window_bounds = array<i64: 1, 64, 128>}]} {
    %c0 = arith.constant 0 : index
    %c0_0 = arith.constant 0 : index
    %c0_1 = arith.constant 0 : index
    %0 = vector.load %arg1[%c0, %c0_0, %c0_1] : memref<1x64x128xf32, #tpu.memory_space<vmem>>, vector<1x64x128xf32>
    %1 = vector.shape_cast %0 : vector<1x64x128xf32> to vector<64x128xf32>
    %2 = arith.truncf %1 : vector<64x128xf32> to vector<64x128xbf16>
    %c0_2 = arith.constant 0 : index
    %c0_3 = arith.constant 0 : index
    %3 = vector.load %arg2[%c0_2, %c0_3] : memref<128x384xbf16, #tpu.memory_space<vmem>>, vector<128x384xbf16>
    %cst = arith.constant dense<0.000000e+00> : vector<64x384xf32>
    %4 = tpu.matmul %2, %3, %cst {dimension_numbers = #tpu.dot_dimension_numbers<[1], [0], [0], [1], [0, 0, 1, 1], [], []>} : vector<64x128xbf16>, vector<128x384xbf16>, vector<64x384xf32> -> vector<64x384xf32>
    %5 = arith.truncf %4 : vector<64x384xf32> to vector<64x384xbf16>
    %6 = vector.extract_strided_slice %5 {offsets = [0, 0], sizes = [64, 128], strides = [1, 1]} : vector<64x384xbf16> to vector<64x128xbf16>
    %7 = vector.extract_strided_slice %5 {offsets = [0, 128], sizes = [64, 128], strides = [1, 1]} : vector<64x384xbf16> to vector<64x128xbf16>
    %8 = vector.extract_strided_slice %5 {offsets = [0, 256], sizes = [64, 128], strides = [1, 1]} : vector<64x384xbf16> to vector<64x128xbf16>
    %9 = tpu.iota {dimensions = array<i32: 0>} : vector<64x64xi32>
    %10 = tpu.iota {dimensions = array<i32: 1>} : vector<64x64xi32>
    %11 = arith.cmpi sle, %10, %9 : vector<64x64xi32>
    %12 = vector.extract_strided_slice %6 {offsets = [0, 0], sizes = [64, 32], strides = [1, 1]} : vector<64x128xbf16> to vector<64x32xbf16>
    %13 = vector.extract_strided_slice %7 {offsets = [0, 0], sizes = [64, 32], strides = [1, 1]} : vector<64x128xbf16> to vector<64x32xbf16>
    %14 = vector.extract_strided_slice %8 {offsets = [0, 0], sizes = [64, 32], strides = [1, 1]} : vector<64x128xbf16> to vector<64x32xbf16>
    %cst_4 = arith.constant dense<0.000000e+00> : vector<64x64xf32>
    %15 = tpu.matmul %12, %13, %cst_4 {dimension_numbers = #tpu.dot_dimension_numbers<[1], [1], [0], [0], [0, 0, 1, 0], [], []>} : vector<64x32xbf16>, vector<64x32xbf16>, vector<64x64xf32> -> vector<64x64xf32>
    %cst_5 = arith.constant -1.000000e+30 : f32
    %16 = vector.broadcast %cst_5 : f32 to vector<64x64xf32>
    %17 = arith.select %11, %15, %16 : vector<64x64xi1>, vector<64x64xf32>
    %cst_6 = arith.constant dense<0xFF800000> : vector<64xf32>
    %18 = vector.multi_reduction <maximumf>, %17, %cst_6 [1] : vector<64x64xf32> to vector<64xf32>
    %19 = vector.shape_cast %18 : vector<64xf32> to vector<64x1xf32>
    %20 = vector.broadcast %19 : vector<64x1xf32> to vector<64x64xf32>
    %21 = arith.subf %17, %20 : vector<64x64xf32>
    %22 = math.exp %21 : vector<64x64xf32>
    %cst_7 = arith.constant dense<0.000000e+00> : vector<64xf32>
    %23 = vector.multi_reduction <add>, %22, %cst_7 [1] : vector<64x64xf32> to vector<64xf32>
    %24 = vector.shape_cast %23 : vector<64xf32> to vector<64x1xf32>
    %25 = tpu.reciprocal %24 {approx = true} : vector<64x1xf32> -> vector<64x1xf32>
    %26 = arith.truncf %22 : vector<64x64xf32> to vector<64x64xbf16>
    %cst_8 = arith.constant dense<0.000000e+00> : vector<64x32xf32>
    %27 = tpu.matmul %26, %14, %cst_8 {dimension_numbers = #tpu.dot_dimension_numbers<[1], [0], [0], [1], [0, 0, 1, 1], [], []>} : vector<64x64xbf16>, vector<64x32xbf16>, vector<64x32xf32> -> vector<64x32xf32>
    %28 = vector.broadcast %25 : vector<64x1xf32> to vector<64x32xf32>
    %29 = arith.mulf %27, %28 : vector<64x32xf32>
    %30 = vector.extract_strided_slice %6 {offsets = [0, 32], sizes = [64, 32], strides = [1, 1]} : vector<64x128xbf16> to vector<64x32xbf16>
    %31 = vector.extract_strided_slice %7 {offsets = [0, 32], sizes = [64, 32], strides = [1, 1]} : vector<64x128xbf16> to vector<64x32xbf16>
    %32 = vector.extract_strided_slice %8 {offsets = [0, 32], sizes = [64, 32], strides = [1, 1]} : vector<64x128xbf16> to vector<64x32xbf16>
    %cst_9 = arith.constant dense<0.000000e+00> : vector<64x64xf32>
    %33 = tpu.matmul %30, %31, %cst_9 {dimension_numbers = #tpu.dot_dimension_numbers<[1], [1], [0], [0], [0, 0, 1, 0], [], []>} : vector<64x32xbf16>, vector<64x32xbf16>, vector<64x64xf32> -> vector<64x64xf32>
    %cst_10 = arith.constant -1.000000e+30 : f32
    %34 = vector.broadcast %cst_10 : f32 to vector<64x64xf32>
    %35 = arith.select %11, %33, %34 : vector<64x64xi1>, vector<64x64xf32>
    %cst_11 = arith.constant dense<0xFF800000> : vector<64xf32>
    %36 = vector.multi_reduction <maximumf>, %35, %cst_11 [1] : vector<64x64xf32> to vector<64xf32>
    %37 = vector.shape_cast %36 : vector<64xf32> to vector<64x1xf32>
    %38 = vector.broadcast %37 : vector<64x1xf32> to vector<64x64xf32>
    %39 = arith.subf %35, %38 : vector<64x64xf32>
    %40 = math.exp %39 : vector<64x64xf32>
    %cst_12 = arith.constant dense<0.000000e+00> : vector<64xf32>
    %41 = vector.multi_reduction <add>, %40, %cst_12 [1] : vector<64x64xf32> to vector<64xf32>
    %42 = vector.shape_cast %41 : vector<64xf32> to vector<64x1xf32>
    %43 = tpu.reciprocal %42 {approx = true} : vector<64x1xf32> -> vector<64x1xf32>
    %44 = arith.truncf %40 : vector<64x64xf32> to vector<64x64xbf16>
    %cst_13 = arith.constant dense<0.000000e+00> : vector<64x32xf32>
    %45 = tpu.matmul %44, %32, %cst_13 {dimension_numbers = #tpu.dot_dimension_numbers<[1], [0], [0], [1], [0, 0, 1, 1], [], []>} : vector<64x64xbf16>, vector<64x32xbf16>, vector<64x32xf32> -> vector<64x32xf32>
    %46 = vector.broadcast %43 : vector<64x1xf32> to vector<64x32xf32>
    %47 = arith.mulf %45, %46 : vector<64x32xf32>
    %48 = vector.extract_strided_slice %6 {offsets = [0, 64], sizes = [64, 32], strides = [1, 1]} : vector<64x128xbf16> to vector<64x32xbf16>
    %49 = vector.extract_strided_slice %7 {offsets = [0, 64], sizes = [64, 32], strides = [1, 1]} : vector<64x128xbf16> to vector<64x32xbf16>
    %50 = vector.extract_strided_slice %8 {offsets = [0, 64], sizes = [64, 32], strides = [1, 1]} : vector<64x128xbf16> to vector<64x32xbf16>
    %cst_14 = arith.constant dense<0.000000e+00> : vector<64x64xf32>
    %51 = tpu.matmul %48, %49, %cst_14 {dimension_numbers = #tpu.dot_dimension_numbers<[1], [1], [0], [0], [0, 0, 1, 0], [], []>} : vector<64x32xbf16>, vector<64x32xbf16>, vector<64x64xf32> -> vector<64x64xf32>
    %cst_15 = arith.constant -1.000000e+30 : f32
    %52 = vector.broadcast %cst_15 : f32 to vector<64x64xf32>
    %53 = arith.select %11, %51, %52 : vector<64x64xi1>, vector<64x64xf32>
    %cst_16 = arith.constant dense<0xFF800000> : vector<64xf32>
    %54 = vector.multi_reduction <maximumf>, %53, %cst_16 [1] : vector<64x64xf32> to vector<64xf32>
    %55 = vector.shape_cast %54 : vector<64xf32> to vector<64x1xf32>
    %56 = vector.broadcast %55 : vector<64x1xf32> to vector<64x64xf32>
    %57 = arith.subf %53, %56 : vector<64x64xf32>
    %58 = math.exp %57 : vector<64x64xf32>
    %cst_17 = arith.constant dense<0.000000e+00> : vector<64xf32>
    %59 = vector.multi_reduction <add>, %58, %cst_17 [1] : vector<64x64xf32> to vector<64xf32>
    %60 = vector.shape_cast %59 : vector<64xf32> to vector<64x1xf32>
    %61 = tpu.reciprocal %60 {approx = true} : vector<64x1xf32> -> vector<64x1xf32>
    %62 = arith.truncf %58 : vector<64x64xf32> to vector<64x64xbf16>
    %cst_18 = arith.constant dense<0.000000e+00> : vector<64x32xf32>
    %63 = tpu.matmul %62, %50, %cst_18 {dimension_numbers = #tpu.dot_dimension_numbers<[1], [0], [0], [1], [0, 0, 1, 1], [], []>} : vector<64x64xbf16>, vector<64x32xbf16>, vector<64x32xf32> -> vector<64x32xf32>
    %64 = vector.broadcast %61 : vector<64x1xf32> to vector<64x32xf32>
    %65 = arith.mulf %63, %64 : vector<64x32xf32>
    %66 = vector.extract_strided_slice %6 {offsets = [0, 96], sizes = [64, 32], strides = [1, 1]} : vector<64x128xbf16> to vector<64x32xbf16>
    %67 = vector.extract_strided_slice %7 {offsets = [0, 96], sizes = [64, 32], strides = [1, 1]} : vector<64x128xbf16> to vector<64x32xbf16>
    %68 = vector.extract_strided_slice %8 {offsets = [0, 96], sizes = [64, 32], strides = [1, 1]} : vector<64x128xbf16> to vector<64x32xbf16>
    %cst_19 = arith.constant dense<0.000000e+00> : vector<64x64xf32>
    %69 = tpu.matmul %66, %67, %cst_19 {dimension_numbers = #tpu.dot_dimension_numbers<[1], [1], [0], [0], [0, 0, 1, 0], [], []>} : vector<64x32xbf16>, vector<64x32xbf16>, vector<64x64xf32> -> vector<64x64xf32>
    %cst_20 = arith.constant -1.000000e+30 : f32
    %70 = vector.broadcast %cst_20 : f32 to vector<64x64xf32>
    %71 = arith.select %11, %69, %70 : vector<64x64xi1>, vector<64x64xf32>
    %cst_21 = arith.constant dense<0xFF800000> : vector<64xf32>
    %72 = vector.multi_reduction <maximumf>, %71, %cst_21 [1] : vector<64x64xf32> to vector<64xf32>
    %73 = vector.shape_cast %72 : vector<64xf32> to vector<64x1xf32>
    %74 = vector.broadcast %73 : vector<64x1xf32> to vector<64x64xf32>
    %75 = arith.subf %71, %74 : vector<64x64xf32>
    %76 = math.exp %75 : vector<64x64xf32>
    %cst_22 = arith.constant dense<0.000000e+00> : vector<64xf32>
    %77 = vector.multi_reduction <add>, %76, %cst_22 [1] : vector<64x64xf32> to vector<64xf32>
    %78 = vector.shape_cast %77 : vector<64xf32> to vector<64x1xf32>
    %79 = tpu.reciprocal %78 {approx = true} : vector<64x1xf32> -> vector<64x1xf32>
    %80 = arith.truncf %76 : vector<64x64xf32> to vector<64x64xbf16>
    %cst_23 = arith.constant dense<0.000000e+00> : vector<64x32xf32>
    %81 = tpu.matmul %80, %68, %cst_23 {dimension_numbers = #tpu.dot_dimension_numbers<[1], [0], [0], [1], [0, 0, 1, 1], [], []>} : vector<64x64xbf16>, vector<64x32xbf16>, vector<64x32xf32> -> vector<64x32xf32>
    %82 = vector.broadcast %79 : vector<64x1xf32> to vector<64x32xf32>
    %83 = arith.mulf %81, %82 : vector<64x32xf32>
    %84 = tpu.concatenate %29, %47, %65, %83 in 1 : vector<64x32xf32>, vector<64x32xf32>, vector<64x32xf32>, vector<64x32xf32> -> vector<64x128xf32>
    %85 = arith.truncf %84 : vector<64x128xf32> to vector<64x128xbf16>
    %c0_24 = arith.constant 0 : index
    %c0_25 = arith.constant 0 : index
    %86 = vector.load %arg3[%c0_24, %c0_25] : memref<128x128xbf16, #tpu.memory_space<vmem>>, vector<128x128xbf16>
    %cst_26 = arith.constant dense<0.000000e+00> : vector<64x128xf32>
    %87 = tpu.matmul %85, %86, %cst_26 {dimension_numbers = #tpu.dot_dimension_numbers<[1], [0], [0], [1], [0, 0, 1, 1], [], []>} : vector<64x128xbf16>, vector<128x128xbf16>, vector<64x128xf32> -> vector<64x128xf32>
    %c0_27 = arith.constant 0 : index
    %c0_28 = arith.constant 0 : index
    %88 = vector.load %arg4[%c0_27, %c0_28] : memref<1x128xf32, #tpu.memory_space<vmem>>, vector<1x128xf32>
    %89 = vector.broadcast %88 : vector<1x128xf32> to vector<64x128xf32>
    %90 = arith.addf %87, %89 : vector<64x128xf32>
    %c0_29 = arith.constant 0 : index
    %c0_30 = arith.constant 0 : index
    %c0_31 = arith.constant 0 : index
    %91 = vector.load %arg5[%c0_29, %c0_30, %c0_31] : memref<1x64x128xf32, #tpu.memory_space<vmem>>, vector<1x64x128xf32>
    %92 = vector.shape_cast %91 : vector<1x64x128xf32> to vector<64x128xf32>
    %93 = vector.shape_cast %90 : vector<64x128xf32> to vector<1x64x128xf32>
    tpu.vector_store %arg5[%c0_29, %c0_30, %c0_31], %93 {strides = array<i32>} : memref<1x64x128xf32, #tpu.memory_space<vmem>>, vector<1x64x128xf32>,
    return
  }
  func.func @transform_0(%arg0: i32) -> (i32, i32, i32) {
    %c0_i32 = arith.constant 0 : i32
    %c0_i32_0 = arith.constant 0 : i32
    %c0_i32_1 = arith.constant 0 : i32
    return %arg0, %c0_i32, %c0_i32_0 : i32, i32, i32
  }
  func.func @transform_1(%arg0: i32) -> (i32, i32) {
    %c0_i32 = arith.constant 0 : i32
    %c0_i32_0 = arith.constant 0 : i32
    %c0_i32_1 = arith.constant 0 : i32
    return %c0_i32, %c0_i32_0 : i32, i32
  }
  func.func @transform_2(%arg0: i32) -> (i32, i32) {
    %c0_i32 = arith.constant 0 : i32
    %c0_i32_0 = arith.constant 0 : i32
    %c0_i32_1 = arith.constant 0 : i32
    return %c0_i32, %c0_i32_0 : i32, i32
  }
  func.func @transform_3(%arg0: i32) -> (i32, i32) {
    %c0_i32 = arith.constant 0 : i32
    %c0_i32_0 = arith.constant 0 : i32
    %c0_i32_1 = arith.constant 0 : i32
    return %c0_i32, %c0_i32_0 : i32, i32
  }
  func.func @transform_4(%arg0: i32) -> (i32, i32, i32) {
    %c0_i32 = arith.constant 0 : i32
    %c0_i32_0 = arith.constant 0 : i32
    %c0_i32_1 = arith.constant 0 : i32
    return %arg0, %c0_i32, %c0_i32_0 : i32, i32, i32
  }
}

</mosaic_0001>

<llo_original>
// kernel: tpu_custom_call.1
$region0: #{tpu_custom_call.1}
  #allocation0 [shape = 'u32[]', space=smem, size = 0x4, offset = 0x4, fixed_abs, tag = 'smem constant byte address 0x4 - core index']
  #allocation1 [shape = 'u32[144,128]{1,0:T(1,128)}', space=vmem, size = 0x12000, scoped, tag = 'internal scratch']
  %s0 = inlined_call_operand.hbm [shape: f32[2,64,128], index: 0, kind: input, shape index: {}]
  %s1 = inlined_call_operand.hbm [shape: bf16[128,384], index: 1, kind: input, shape index: {}]
  %s2 = inlined_call_operand.hbm [shape: bf16[128,128], index: 2, kind: input, shape index: {}]
  %s3 = inlined_call_operand.vmem [shape: f32[1,128], index: 3, kind: input, shape index: {}]
  %s4 = inlined_call_operand.hbm [shape: f32[2,64,128], index: 4, kind: output, shape index: {}]
  %s5 = sld [smem:[#allocation0]]
  $region61: #{tpu_custom_call.1} parent=0
    _
  %s7 = ssub.s32 1, %s5
  %s8 = scalar_select 0, %s7, %s5
  $region1: #{tpu_custom_call.1} parent=0
    #allocation2 [shape = 'u8[65536]{0}', space=vmem, size = 0x10000, scoped, tag = 'input window, operand 0']
    #allocation3 [shape = 's32[2]{0}', space=sflag, size = 0x8, scoped, tag = 'scoped memory for tpu_custom_call.1']
    #allocation4 [shape = 's32[2]{0}', space=sflag, size = 0x8, scoped, tag = 'scoped memory for tpu_custom_call.1']
    #allocation5 [shape = 'u8[98304]{0}', space=vmem, size = 0x18000, scoped, tag = 'input window, operand 1, single buffered']
    #allocation6 [shape = 's32[1]{0}', space=sflag, size = 0x4, scoped, tag = 'scoped memory for tpu_custom_call.1']
    #allocation7 [shape = 'u8[32768]{0}', space=vmem, size = 0x8000, scoped, tag = 'input window, operand 2, single buffered']
    #allocation8 [shape = 'u8[65536]{0}', space=vmem, size = 0x10000, scoped, tag = 'output window, operand 0']
    %9 = vsyncpa [#allocation3], 0
    %s10 = scalar_lea.sflag [#allocation3], 1
    %11 = vsyncpa %s10, 0
    %12 = vsyncpa [#allocation6], 0
    %13 = vsyncpa [#allocation4], 0
    %s14 = scalar_lea.sflag [#allocation4], 1
    %15 = vsyncpa %s14, 0
    loop: start=0, step=1, limit=4
    $region2: #{tpu_custom_call.1} parent=1 // loop_pre_header
      _
    $region3: #{tpu_custom_call.1} parent=1 // loop_header
      %s17 = sphi 0, %s21
      %p18 = scmp.ge.s32.totalorder %s17, 4
      %s27 = sphi 0, %s29
      %s30 = sphi 0, %s27
      %s31 = sphi 0, %s30
      %s47 = sphi 0, %s31
      %s51 = sphi 0, %s51
      %s53 = sphi 0, %s51
      %s54 = sphi 0, %s53
      %s68 = sphi 0, %s54
      %s72 = sphi 0, %s72
      %s74 = sphi 0, %s72
      %s75 = sphi 0, %s74
      %s89 = sphi 0, %s75
      %s93 = sphi 0, %s93
      %s95 = sphi 0, %s93
      %s96 = sphi 0, %s95
      %s110 = sphi 0, %s96
      %s116 = sphi 0, %s118
      %s119 = sphi 0, %s116
      %s120 = sphi 0, %s119
      %s136 = sphi 0, %s120
    $region4: #{tpu_custom_call.1} parent=1 // loop_header_branch
      %20 = sbr.rel (%p18) target = $region8
    $region5: #{tpu_custom_call.1} parent=1 // loop_body
      %s22 = ssub.s32 %s17, 1
      %s23 = ssub.s32 %s17, 2
      %s24 = sadd.s32 %s17, 1
      %s25 = ssub.s32 %s17, %s24
      %p26 = scmp.eq.s32.totalorder %s25, 0
      %s28 = sadd.s32 %s27, 1
      %s29 = scalar_select %p26, %s27, %s28
      %p32 = pneg %p26
      %p33 = scmp.eq.s32.totalorder %s17, 1
      %p34 = por %p32, %p33
      %p35 = scmp.ne.s32.totalorder %s27, %s30
      %p36 = scmp.eq.s32.totalorder %s17, 0
      %p37 = por %p35, %p36
      %p38 = scmp.ne.s32.totalorder %s27, %s30
      %p39 = scmp.eq.s32.totalorder %s22, 1
      %p40 = por %p38, %p39
      %p41 = scmp.ne.s32.totalorder %s30, %s31
      %p42 = scmp.eq.s32.totalorder %s22, 0
      %p43 = por %p41, %p42
      %p44 = scmp.ne.s32.totalorder %s30, %s31
      %p45 = scmp.eq.s32.totalorder %s23, 1
      %p46 = por %p44, %p45
      %p48 = scmp.ne.s32.totalorder %s31, %s47
      %p49 = scmp.eq.s32.totalorder %s23, 0
      %p50 = por %p48, %p49
      %s52 = sadd.s32 %s51, 1
      %p55 = scmp.eq.s32.totalorder %s17, 1
      %p56 = scmp.ne.s32.totalorder %s51, %s53
      %p57 = scmp.eq.s32.totalorder %s17, 0
      %p58 = por %p56, %p57
      %p59 = scmp.ne.s32.totalorder %s51, %s53
      %p60 = scmp.eq.s32.totalorder %s22, 1
      %p61 = por %p59, %p60
      %p62 = scmp.ne.s32.totalorder %s53, %s54
      %p63 = scmp.eq.s32.totalorder %s22, 0
      %p64 = por %p62, %p63
      %p65 = scmp.ne.s32.totalorder %s53, %s54
      %p66 = scmp.eq.s32.totalorder %s23, 1
      %p67 = por %p65, %p66
      %p69 = scmp.ne.s32.totalorder %s54, %s68
      %p70 = scmp.eq.s32.totalorder %s23, 0
      %p71 = por %p69, %p70
      %s73 = sadd.s32 %s72, 1
      %p76 = scmp.eq.s32.totalorder %s17, 1
      %p77 = scmp.ne.s32.totalorder %s72, %s74
      %p78 = scmp.eq.s32.totalorder %s17, 0
      %p79 = por %p77, %p78
      %p80 = scmp.ne.s32.totalorder %s72, %s74
      %p81 = scmp.eq.s32.totalorder %s22, 1
      %p82 = por %p80, %p81
      %p83 = scmp.ne.s32.totalorder %s74, %s75
      %p84 = scmp.eq.s32.totalorder %s22, 0
      %p85 = por %p83, %p84
      %p86 = scmp.ne.s32.totalorder %s74, %s75
      %p87 = scmp.eq.s32.totalorder %s23, 1
      %p88 = por %p86, %p87
      %p90 = scmp.ne.s32.totalorder %s75, %s89
      %p91 = scmp.eq.s32.totalorder %s23, 0
      %p92 = por %p90, %p91
      %s94 = sadd.s32 %s93, 1
      %p97 = scmp.eq.s32.totalorder %s17, 1
      %p98 = scmp.ne.s32.totalorder %s93, %s95
      %p99 = scmp.eq.s32.totalorder %s17, 0
      %p100 = por %p98, %p99
      %p101 = scmp.ne.s32.totalorder %s93, %s95
      %p102 = scmp.eq.s32.totalorder %s22, 1
      %p103 = por %p101, %p102
      %p104 = scmp.ne.s32.totalorder %s95, %s96
      %p105 = scmp.eq.s32.totalorder %s22, 0
      %p106 = por %p104, %p105
      %p107 = scmp.ne.s32.totalorder %s95, %s96
      %p108 = scmp.eq.s32.totalorder %s23, 1
      %p109 = por %p107, %p108
      %p111 = scmp.ne.s32.totalorder %s96, %s110
      %p112 = scmp.eq.s32.totalorder %s23, 0
      %p113 = por %p111, %p112
      %s114 = ssub.s32 %s17, %s24
      %p115 = scmp.eq.s32.totalorder %s114, 0
      %s117 = sadd.s32 %s116, 1
      %s118 = scalar_select %p115, %s116, %s117
      %p121 = pneg %p115
      %p122 = scmp.eq.s32.totalorder %s17, 1
      %p123 = por %p121, %p122
      %p124 = scmp.ne.s32.totalorder %s116, %s119
      %p125 = scmp.eq.s32.totalorder %s17, 0
      %p126 = por %p124, %p125
      %p127 = scmp.ne.s32.totalorder %s116, %s119
      %p128 = scmp.eq.s32.totalorder %s22, 1
      %p129 = por %p127, %p128
      %p130 = scmp.ne.s32.totalorder %s119, %s120
      %p131 = scmp.eq.s32.totalorder %s22, 0
      %p132 = por %p130, %p131
      %p133 = scmp.ne.s32.totalorder %s119, %s120
      %p134 = scmp.eq.s32.totalorder %s23, 1
      %p135 = por %p133, %p134
      %p137 = scmp.ne.s32.totalorder %s120, %s136
      %p138 = scmp.eq.s32.totalorder %s23, 0
      %p139 = por %p137, %p138
      %p140 = scmp.le.s32.totalorder 1, %s17
      %p141 = scmp.lt.s32.totalorder %s17, 3
      %p142 = pnand %p140, %p141
      %p143 = pneg %p142
      // Predicated region
      $region9: #{tpu_custom_call.1} parent=5 // pred_check
        _
      $region10: #{tpu_custom_call.1} parent=5 // pred_check_branch
        %145 = sbr.rel (%p142) target = $region12
      $region11: #{tpu_custom_call.1} parent=5 // pred_region
        %s146 = ssub.s32 %s17, 1
        // Predicated region
        $region13: #{tpu_custom_call.1} parent=11 // pred_check
          %p147 = pneg %p64
        $region14: #{tpu_custom_call.1} parent=11 // pred_check_branch
          %149 = sbr.rel (%p147) target = $region16
        $region15: #{tpu_custom_call.1} parent=11 // pred_region
          %s151 = ssub.s32 3072, 3072
          %152 = vsyncadd [#allocation6], %s151
          %s153 = sshll.u32 [#allocation5], 4
          %s154 = int_to_ptr.vmem [resolvable:$true] %s153
          %159 = dma.hbm_to_vmem [thread:$0]  %s1, 3072, %s154, [#allocation6], 192, 192, 12
        $region16: #{tpu_custom_call.1} parent=11 // pred_fallthru
          _
        // Predicated region
        $region17: #{tpu_custom_call.1} parent=11 // pred_check
          %p160 = pneg %p85
        $region18: #{tpu_custom_call.1} parent=11 // pred_check_branch
          %162 = sbr.rel (%p160) target = $region20
        $region19: #{tpu_custom_call.1} parent=11 // pred_region
          %s164 = ssub.s32 1024, 1024
          %165 = vsyncadd [#allocation6], %s164
          %s166 = sshll.u32 [#allocation7], 4
          %s167 = int_to_ptr.vmem [resolvable:$true] %s166
          %172 = dma.hbm_to_vmem [thread:$0]  %s2, 1024, %s167, [#allocation6], 64, 64, 4
        $region20: #{tpu_custom_call.1} parent=11 // pred_fallthru
          _
        // Predicated region
        $region21: #{tpu_custom_call.1} parent=11 // pred_check
          %p173 = pneg %p106
        $region22: #{tpu_custom_call.1} parent=11 // pred_check_branch
          %175 = sbr.rel (%p173) target = $region24
        $region23: #{tpu_custom_call.1} parent=11 // pred_region
          _
        $region24: #{tpu_custom_call.1} parent=11 // pred_fallthru
          _
      $region12: #{tpu_custom_call.1} parent=5 // pred_fallthru
        _
      %p176 = scmp.lt.s32.totalorder %s17, 2
      // Predicated region
      $region25: #{tpu_custom_call.1} parent=5 // pred_check
        %p177 = pneg %p176
      $region26: #{tpu_custom_call.1} parent=5 // pred_check_branch
        %179 = sbr.rel (%p177) target = $region28
      $region27: #{tpu_custom_call.1} parent=5 // pred_region
        // Predicated region
        $region29: #{tpu_custom_call.1} parent=27 // pred_check
          %p180 = pneg %p37
        $region30: #{tpu_custom_call.1} parent=27 // pred_check_branch
          %182 = sbr.rel (%p180) target = $region32
        $region31: #{tpu_custom_call.1} parent=27 // pred_region
          %s183 = sand.u32 %s27, 1
          %s184 = scalar_lea.sflag [#allocation3], %s183
          %s185 = sand.u32 %s27, 1
          %s186 = smul.addr %s185, 64
          %s187 = scalar_lea.vmem [#allocation2], %s186
          %s189 = ssub.s32 1024, 1024
          %190 = vsyncadd %s184, %s189
          %s191 = smul.addr %s17, 8
          %s192 = smul.addr %s191, 128
          %s193 = scalar_lea.hbm %s0, %s192
          %s194 = sshll.u32 %s187, 4
          %s195 = int_to_ptr.vmem [resolvable:$true] %s194
          %200 = dma.hbm_to_vmem [thread:$0]  %s193, 1024, %s195, %s184, 128, 128, 8
        $region32: #{tpu_custom_call.1} parent=27 // pred_fallthru
          _
      $region28: #{tpu_custom_call.1} parent=5 // pred_fallthru
        _
      %p201 = scmp.le.s32.totalorder 1, %s17
      %p202 = scmp.lt.s32.totalorder %s17, 3
      %p203 = pnand %p201, %p202
      %p204 = pneg %p203
      // Predicated region
      $region33: #{tpu_custom_call.1} parent=5 // pred_check
        _
      $region34: #{tpu_custom_call.1} parent=5 // pred_check_branch
        %206 = sbr.rel (%p203) target = $region36
      $region35: #{tpu_custom_call.1} parent=5 // pred_region
        %s207 = ssub.s32 %s17, 1
        %s208 = sand.u32 %s30, 1
        %s209 = scalar_lea.sflag [#allocation3], %s208
        %s210 = sand.u32 %s30, 1
        %s211 = smul.addr %s210, 64
        %s212 = scalar_lea.vmem [#allocation2], %s211
        // Predicated region
        $region37: #{tpu_custom_call.1} parent=35 // pred_check
          %p213 = pneg %p43
        $region38: #{tpu_custom_call.1} parent=35 // pred_check_branch
          %215 = sbr.rel (%p213) target = $region40
        $region39: #{tpu_custom_call.1} parent=35 // pred_region
          %216 = dma.done %s209, 1024
        $region40: #{tpu_custom_call.1} parent=35 // pred_fallthru
          _
        // Predicated region
        $region41: #{tpu_custom_call.1} parent=35 // pred_check
          %p217 = pneg %p64
        $region42: #{tpu_custom_call.1} parent=35 // pred_check_branch
          %219 = sbr.rel (%p217) target = $region44
        $region43: #{tpu_custom_call.1} parent=35 // pred_region
          %220 = dma.done [#allocation6], 3072
        $region44: #{tpu_custom_call.1} parent=35 // pred_fallthru
          _
        // Predicated region
        $region45: #{tpu_custom_call.1} parent=35 // pred_check
          %p221 = pneg %p85
        $region46: #{tpu_custom_call.1} parent=35 // pred_check_branch
          %223 = sbr.rel (%p221) target = $region48
        $region47: #{tpu_custom_call.1} parent=35 // pred_region
          %224 = dma.done [#allocation6], 1024
        $region48: #{tpu_custom_call.1} parent=35 // pred_fallthru
          _
        %s225 = sand.u32 %s30, 1
        %s226 = scalar_lea.sflag [#allocation3], %s225
        %s227 = sand.u32 %s30, 1
        %s228 = smul.addr %s227, 64
        %s229 = scalar_lea.vmem [#allocation2], %s228
        %p230 = pneg %p43
        %p231 = pneg %p40
        %p232 = pneg %p64
        %p233 = pneg %p61
        %p234 = pneg %p85
        %p235 = pneg %p82
        %p236 = pneg %p106
        %p237 = pneg %p103
        %p238 = pneg %p132
        %p239 = pneg %p129
        %s240 = sand.u32 %s119, 1
        %s241 = scalar_lea.sflag [#allocation4], %s240
        %s242 = sand.u32 %s119, 1
        %s243 = smul.addr %s242, 64
        %s244 = scalar_lea.vmem [#allocation8], %s243
        %v246 = vld [vmem:[%s212] sm:$0xff]
        %v247 = vld [vmem:[%s212 + $0x8] sm:$0xff]
        %v248 = vld [vmem:[%s212 + $0x10] sm:$0xff]
        %v249 = vld [vmem:[%s212 + $0x18] sm:$0xff]
        %v250 = vld [vmem:[%s212 + $0x20] sm:$0xff]
        %v251 = vld [vmem:[%s212 + $0x28] sm:$0xff]
        %v252 = vld [vmem:[%s212 + $0x30] sm:$0xff]
        %v253 = vld [vmem:[%s212 + $0x38] sm:$0xff]
        %v254 = vpack.c.bf16 %v247, %v246
        %v255 = vpack.c.bf16 %v249, %v248
        %v256 = vpack.c.bf16 %v251, %v250
        %v257 = vpack.c.bf16 %v253, %v252
        %v258 = vld [vmem:[#allocation5] sm:$0xff]
        %v259 = vld [vmem:[#allocation5 + $0x8] sm:$0xf]
        %v260 = vld [vmem:[#allocation5 + $0xc] sm:$0xff]
        %v261 = vld [vmem:[#allocation5 + $0x14] sm:$0xf]
        %v262 = vld [vmem:[#allocation5 + $0x18] sm:$0xff]
        %v263 = vld [vmem:[#allocation5 + $0x20] sm:$0xf]
        %v264 = vld [vmem:[#allocation5 + $0x24] sm:$0xff]
        %v265 = vld [vmem:[#allocation5 + $0x2c] sm:$0xf]
        %v266 = vld [vmem:[#allocation5 + $0x30] sm:$0xff]
        %v267 = vld [vmem:[#allocation5 + $0x38] sm:$0xf]
        %v268 = vld [vmem:[#allocation5 + $0x3c] sm:$0xff]
        %v269 = vld [vmem:[#allocation5 + $0x44] sm:$0xf]
        %v270 = vld [vmem:[#allocation5 + $0x48] sm:$0xff]
        %v271 = vld [vmem:[#allocation5 + $0x50] sm:$0xf]
        %v272 = vld [vmem:[#allocation5 + $0x54] sm:$0xff]
        %v273 = vld [vmem:[#allocation5 + $0x5c] sm:$0xf]
        %v274 = vld [vmem:[#allocation5 + $0x60] sm:$0xff]
        %v275 = vld [vmem:[#allocation5 + $0x68] sm:$0xf]
        %v276 = vld [vmem:[#allocation5 + $0x6c] sm:$0xff]
        %v277 = vld [vmem:[#allocation5 + $0x74] sm:$0xf]
        %v278 = vld [vmem:[#allocation5 + $0x78] sm:$0xff]
        %v279 = vld [vmem:[#allocation5 + $0x80] sm:$0xf]
        %v280 = vld [vmem:[#allocation5 + $0x84] sm:$0xff]
        %v281 = vld [vmem:[#allocation5 + $0x8c] sm:$0xf]
        %v282 = vld [vmem:[#allocation5 + $0x90] sm:$0xff]
        %v283 = vld [vmem:[#allocation5 + $0x98] sm:$0xf]
        %v284 = vld [vmem:[#allocation5 + $0x9c] sm:$0xff]
        %v285 = vld [vmem:[#allocation5 + $0xa4] sm:$0xf]
        %v286 = vld [vmem:[#allocation5 + $0xa8] sm:$0xff]
        %v287 = vld [vmem:[#allocation5 + $0xb0] sm:$0xf]
        %v288 = vld [vmem:[#allocation5 + $0xb4] sm:$0xff]
        %v289 = vld [vmem:[#allocation5 + $0xbc] sm:$0xf]
        %v322 = vunpack.c.l.b16 %v258
        %v323 = vunpack.c.h.b16 %v258
        %v324 = vunpack.c.l.b16 %v259
        %v325 = vunpack.c.l.b16 %v260
        %v326 = vunpack.c.h.b16 %v260
        %v327 = vunpack.c.l.b16 %v261
        %v328 = vunpack.c.l.b16 %v262
        %v329 = vunpack.c.h.b16 %v262
        %v330 = vunpack.c.l.b16 %v263
        %v331 = vunpack.c.l.b16 %v264
        %v332 = vunpack.c.h.b16 %v264
        %v333 = vunpack.c.l.b16 %v265
        %v334 = vunpack.c.l.b16 %v266
        %v335 = vunpack.c.h.b16 %v266
        %v336 = vunpack.c.l.b16 %v267
        %v337 = vunpack.c.l.b16 %v268
        %v338 = vunpack.c.h.b16 %v268
        %v339 = vunpack.c.l.b16 %v269
        %v340 = vunpack.c.l.b16 %v270
        %v341 = vunpack.c.h.b16 %v270
        %v342 = vunpack.c.l.b16 %v271
        %v343 = vunpack.c.l.b16 %v272
        %v344 = vunpack.c.h.b16 %v272
        %v345 = vunpack.c.l.b16 %v273
        %v346 = vunpack.c.l.b16 %v274
        %v347 = vunpack.c.h.b16 %v274
        %v348 = vunpack.c.l.b16 %v275
        %v349 = vunpack.c.l.b16 %v276
        %v350 = vunpack.c.h.b16 %v276
        %v351 = vunpack.c.l.b16 %v277
        %v352 = vunpack.c.l.b16 %v278
        %v353 = vunpack.c.h.b16 %v278
        %v354 = vunpack.c.l.b16 %v279
        %v355 = vunpack.c.l.b16 %v280
        %v356 = vunpack.c.h.b16 %v280
        %v357 = vunpack.c.l.b16 %v281
        %v358 = vunpack.c.l.b16 %v282
        %v359 = vunpack.c.h.b16 %v282
        %v360 = vunpack.c.l.b16 %v283
        %v361 = vunpack.c.l.b16 %v284
        %v362 = vunpack.c.h.b16 %v284
        %v363 = vunpack.c.l.b16 %v285
        %v364 = vunpack.c.l.b16 %v286
        %v365 = vunpack.c.h.b16 %v286
        %v366 = vunpack.c.l.b16 %v287
        %v367 = vunpack.c.l.b16 %v288
        %v368 = vunpack.c.h.b16 %v288
        %v369 = vunpack.c.l.b16 %v289
        %v370 = vpack.c.b16 %v325, %v322
        %v371 = vpack.c.b16 %v326, %v323
        %v372 = vpack.c.b16 %v327, %v324
        %v373 = vpack.c.b16 %v331, %v328
        %v374 = vpack.c.b16 %v332, %v329
        %v375 = vpack.c.b16 %v333, %v330
        %v376 = vpack.c.b16 %v337, %v334
        %v377 = vpack.c.b16 %v338, %v335
        %v378 = vpack.c.b16 %v339, %v336
        %v379 = vpack.c.b16 %v343, %v340
        %v380 = vpack.c.b16 %v344, %v341
        %v381 = vpack.c.b16 %v345, %v342
        %v382 = vpack.c.b16 %v349, %v346
        %v383 = vpack.c.b16 %v350, %v347
        %v384 = vpack.c.b16 %v351, %v348
        %v385 = vpack.c.b16 %v355, %v352
        %v386 = vpack.c.b16 %v356, %v353
        %v387 = vpack.c.b16 %v357, %v354
        %v388 = vpack.c.b16 %v361, %v358
        %v389 = vpack.c.b16 %v362, %v359
        %v390 = vpack.c.b16 %v363, %v360
        %v391 = vpack.c.b16 %v367, %v364
        %v392 = vpack.c.b16 %v368, %v365
        %v393 = vpack.c.b16 %v369, %v366
        %418 = vmatprep.subr.bf16.mxu0 %v392
        %419 = vmatpush1.bf16.msra.mxu0 %v391
        %420 = vmatprep.subr.bf16.mxu0 %v389
        %421 = vmatpush1.bf16.msra.mxu0 %v388
        %422 = vmatprep.subr.bf16.mxu0 %v386
        %423 = vmatpush1.bf16.msra.mxu0 %v385
        %424 = vmatprep.subr.bf16.mxu0 %v383
        %425 = vmatpush1.bf16.msra.mxu0 %v382
        %426 = vmatprep.subr.bf16.mxu0 %v380
        %427 = vmatpush1.bf16.msra.mxu0 %v379
        %428 = vmatprep.subr.bf16.mxu0 %v377
        %429 = vmatpush1.bf16.msra.mxu0 %v376
        %430 = vmatprep.subr.bf16.mxu0 %v374
        %431 = vmatpush1.bf16.msra.mxu0 %v373
        %432 = vmatprep.subr.bf16.mxu0 %v371
        %433 = vmatpush1.bf16.msra.mxu0 %v370
        %434 = vmatprep.subr.bf16.mxu0 0
        %435 = vmatpush2.bf16.msra.mxu0 0
        %436 = vmatprep.subr.bf16.mxu0 0
        %437 = vmatpush2.bf16.msra.mxu0 0
        %438 = vmatprep.subr.bf16.mxu0 0
        %439 = vmatpush2.bf16.msra.mxu0 0
        %440 = vmatprep.subr.bf16.mxu0 0
        %441 = vmatpush2.bf16.msra.mxu0 0
        %442 = vmatprep.subr.bf16.mxu0 0
        %443 = vmatpush2.bf16.msra.mxu0 0
        %444 = vmatprep.subr.bf16.mxu0 0
        %445 = vmatpush2.bf16.msra.mxu0 0
        %446 = vmatprep.subr.bf16.mxu0 0
        %447 = vmatpush2.bf16.msra.mxu0 0
        %448 = vmatprep.subr.bf16.mxu0 0
        %449 = vmatpush2.bf16.msra.mxu0 0
        %450 = vmatprep.mubr.bf16.mxu0 0
        %451 = vmatmul.mubr.bf16.gmra.mxu0 %v254
        %v452 = vpop.f32.mrf.mxu0
        %v453 = vadd.f32 0.0, %v452
        %v454 = vpop.f32.mrf.mxu0
        %v455 = vadd.f32 0.0, %v454
        %v456 = vpop.f32.mrf.mxu0
        %v457 = vadd.f32 0.0, %v456
        %v458 = vpop.f32.mrf.mxu0
        %v459 = vadd.f32 0.0, %v458
        %460 = vmatprep.mubr.bf16.mxu0 0
        %461 = vmatmul.mubr.bf16.gmra.mxu0 %v255
        %v462 = vpop.f32.mrf.mxu0
        %v463 = vadd.f32 0.0, %v462
        %v464 = vpop.f32.mrf.mxu0
        %v465 = vadd.f32 0.0, %v464
        %v466 = vpop.f32.mrf.mxu0
        %v467 = vadd.f32 0.0, %v466
        %v468 = vpop.f32.mrf.mxu0
        %v469 = vadd.f32 0.0, %v468
        %470 = vmatprep.mubr.bf16.mxu0 0
        %471 = vmatmul.mubr.bf16.gmra.mxu0 %v256
        %v472 = vpop.f32.mrf.mxu0
        %v473 = vadd.f32 0.0, %v472
        %v474 = vpop.f32.mrf.mxu0
        %v475 = vadd.f32 0.0, %v474
        %v476 = vpop.f32.mrf.mxu0
        %v477 = vadd.f32 0.0, %v476
        %v478 = vpop.f32.mrf.mxu0
        %v479 = vadd.f32 0.0, %v478
        %480 = vmatprep.mubr.bf16.mxu0 0
        %481 = vmatmul.mubr.bf16.gmra.mxu0 %v257
        %v482 = vpop.f32.mrf.mxu0
        %v483 = vadd.f32 0.0, %v482
        %v484 = vpop.f32.mrf.mxu0
        %v485 = vadd.f32 0.0, %v484
        %v486 = vpop.f32.mrf.mxu0
        %v487 = vadd.f32 0.0, %v486
        %v488 = vpop.f32.mrf.mxu0
        %v489 = vadd.f32 0.0, %v488
        %490 = vdwg.mxu0
        %491 = vmatprep.subr.bf16.mxu0 0
        %492 = vmatpush1.bf16.msra.mxu0 %v393
        %493 = vmatprep.subr.bf16.mxu0 0
        %494 = vmatpush1.bf16.msra.mxu0 %v390
        %495 = vmatprep.subr.bf16.mxu0 0
        %496 = vmatpush1.bf16.msra.mxu0 %v387
        %497 = vmatprep.subr.bf16.mxu0 0
        %498 = vmatpush1.bf16.msra.mxu0 %v384
        %499 = vmatprep.subr.bf16.mxu0 0
        %500 = vmatpush1.bf16.msra.mxu0 %v381
        %501 = vmatprep.subr.bf16.mxu0 0
        %502 = vmatpush1.bf16.msra.mxu0 %v378
        %503 = vmatprep.subr.bf16.mxu0 0
        %504 = vmatpush1.bf16.msra.mxu0 %v375
        %505 = vmatprep.subr.bf16.mxu0 0
        %506 = vmatpush1.bf16.msra.mxu0 %v372
        %507 = vmatprep.subr.bf16.mxu0 0
        %508 = vmatpush2.bf16.msra.mxu0 0
        %509 = vmatprep.subr.bf16.mxu0 0
        %510 = vmatpush2.bf16.msra.mxu0 0
        %511 = vmatprep.subr.bf16.mxu0 0
        %512 = vmatpush2.bf16.msra.mxu0 0
        %513 = vmatprep.subr.bf16.mxu0 0
        %514 = vmatpush2.bf16.msra.mxu0 0
        %515 = vmatprep.subr.bf16.mxu0 0
        %516 = vmatpush2.bf16.msra.mxu0 0
        %517 = vmatprep.subr.bf16.mxu0 0
        %518 = vmatpush2.bf16.msra.mxu0 0
        %519 = vmatprep.subr.bf16.mxu0 0
        %520 = vmatpush2.bf16.msra.mxu0 0
        %521 = vmatprep.subr.bf16.mxu0 0
        %522 = vmatpush2.bf16.msra.mxu0 0
        %523 = vmatprep.mubr.bf16.mxu0 0
        %524 = vmatmul.mubr.bf16.gmra.mxu0 %v254
        %v525 = vpop.f32.mrf.mxu0
        %v526 = vadd.f32 0.0, %v525
        %v527 = vpop.f32.mrf.mxu0
        %v528 = vpop.f32.mrf.mxu0
        %v529 = vadd.f32 0.0, %v528
        %v530 = vpop.f32.mrf.mxu0
        %531 = vmatprep.mubr.bf16.mxu0 0
        %532 = vmatmul.mubr.bf16.gmra.mxu0 %v255
        %v533 = vpop.f32.mrf.mxu0
        %v534 = vadd.f32 0.0, %v533
        %v535 = vpop.f32.mrf.mxu0
        %v536 = vpop.f32.mrf.mxu0
        %v537 = vadd.f32 0.0, %v536
        %v538 = vpop.f32.mrf.mxu0
        %539 = vmatprep.mubr.bf16.mxu0 0
        %540 = vmatmul.mubr.bf16.gmra.mxu0 %v256
        %v541 = vpop.f32.mrf.mxu0
        %v542 = vadd.f32 0.0, %v541
        %v543 = vpop.f32.mrf.mxu0
        %v544 = vpop.f32.mrf.mxu0
        %v545 = vadd.f32 0.0, %v544
        %v546 = vpop.f32.mrf.mxu0
        %547 = vmatprep.mubr.bf16.mxu0 0
        %548 = vmatmul.mubr.bf16.gmra.mxu0 %v257
        %v549 = vpop.f32.mrf.mxu0
        %v550 = vadd.f32 0.0, %v549
        %v551 = vpop.f32.mrf.mxu0
        %v552 = vpop.f32.mrf.mxu0
        %v553 = vadd.f32 0.0, %v552
        %v554 = vpop.f32.mrf.mxu0
        %555 = vdwg.mxu0
        %v556 = vpack.c.bf16 %v457, %v453
        %v557 = vpack.c.bf16 %v459, %v455
        %v558 = vpack.c.bf16 %v529, %v526
        %v559 = vpack.c.bf16 %v467, %v463
        %v560 = vpack.c.bf16 %v469, %v465
        %v561 = vpack.c.bf16 %v537, %v534
        %v562 = vpack.c.bf16 %v477, %v473
        %v563 = vpack.c.bf16 %v479, %v475
        %v564 = vpack.c.bf16 %v545, %v542
        %v565 = vpack.c.bf16 %v487, %v483
        %v566 = vpack.c.bf16 %v489, %v485
        %v567 = vpack.c.bf16 %v553, %v550
        %v568 = vlaneseq
        %v569 = vshrl.u32 %v568, 7
        %v570 = vadd.s32 %v569, 8
        %v571 = vadd.s32 %v569, 16
        %v572 = vadd.s32 %v569, 24
        %v573 = vadd.s32 %v569, 32
        %v574 = vadd.s32 %v569, 40
        %v575 = vadd.s32 %v569, 48
        %v576 = vadd.s32 %v569, 56
        %v577 = vlaneseq
        %v578 = vand.u32 %v577, 127
        %vm579 = vcmp.le.s32.totalorder %v578, %v569
        %vm580 = vcmp.le.s32.totalorder %v578, %v570
        %vm581 = vcmp.le.s32.totalorder %v578, %v571
        %vm582 = vcmp.le.s32.totalorder %v578, %v572
        %vm583 = vcmp.le.s32.totalorder %v578, %v573
        %vm584 = vcmp.le.s32.totalorder %v578, %v574
        %vm585 = vcmp.le.s32.totalorder %v578, %v575
        %vm586 = vcmp.le.s32.totalorder %v578, %v576
        %vm587 = vcmask 261120
        %v589 = vsel %vm587, %v556, 0
        %v592 = vsel %vm587, %v559, 0
        %v595 = vsel %vm587, %v562, 0
        %v598 = vsel %vm587, %v565, 0
        %v601 = vsel %vm587, %v557, 0
        %v604 = vsel %vm587, %v560, 0
        %v607 = vsel %vm587, %v563, 0
        %v610 = vsel %vm587, %v566, 0
        %612 = vmatprep.subr.bf16.mxu0 0
        %613 = vmatpush1.bf16.xpose.msra.mxu0 0
        %614 = vmatprep.subr.bf16.mxu0 0
        %615 = vmatpush1.bf16.xpose.msra.mxu0 0
        %616 = vmatprep.subr.bf16.mxu0 0
        %617 = vmatpush1.bf16.xpose.msra.mxu0 0
        %618 = vmatprep.subr.bf16.mxu0 0
        %619 = vmatpush1.bf16.xpose.msra.mxu0 0
        %620 = vmatprep.subr.bf16.mxu0 0
        %621 = vmatpush1.bf16.xpose.msra.mxu0 %v610
        %622 = vmatprep.subr.bf16.mxu0 0
        %623 = vmatpush1.bf16.xpose.msra.mxu0 %v607
        %624 = vmatprep.subr.bf16.mxu0 0
        %625 = vmatpush1.bf16.xpose.msra.mxu0 %v604
        %626 = vmatprep.subr.bf16.mxu0 0
        %627 = vmatpush1.bf16.xpose.msra.mxu0 %v601
        %628 = vmatprep.subr.bf16.mxu0 0
        %629 = vmatpush2.bf16.xpose.msra.mxu0 0
        %630 = vmatprep.subr.bf16.mxu0 0
        %631 = vmatpush2.bf16.xpose.msra.mxu0 0
        %632 = vmatprep.subr.bf16.mxu0 0
        %633 = vmatpush2.bf16.xpose.msra.mxu0 0
        %634 = vmatprep.subr.bf16.mxu0 0
        %635 = vmatpush2.bf16.xpose.msra.mxu0 0
        %636 = vmatprep.subr.bf16.mxu0 0
        %637 = vmatpush2.bf16.xpose.msra.mxu0 0
        %638 = vmatprep.subr.bf16.mxu0 0
        %639 = vmatpush2.bf16.xpose.msra.mxu0 0
        %640 = vmatprep.subr.bf16.mxu0 0
        %641 = vmatpush2.bf16.xpose.msra.mxu0 0
        %642 = vmatprep.subr.bf16.mxu0 0
        %643 = vmatpush2.bf16.xpose.msra.mxu0 0
        %644 = vmatprep.mubr.bf16.mxu0 0
        %645 = vmatmul.mubr.bf16.gmra.mxu0 %v589
        %v646 = vpop.f32.mrf.mxu0
        %v647 = vadd.f32 0.0, %v646
        %v648 = vpop.f32.mrf.mxu0
        %v649 = vpop.f32.mrf.mxu0
        %v650 = vadd.f32 0.0, %v649
        %v651 = vpop.f32.mrf.mxu0
        %652 = vmatprep.mubr.bf16.mxu0 0
        %653 = vmatmul.mubr.bf16.gmra.mxu0 %v592
        %v654 = vpop.f32.mrf.mxu0
        %v655 = vadd.f32 0.0, %v654
        %v656 = vpop.f32.mrf.mxu0
        %v657 = vpop.f32.mrf.mxu0
        %v658 = vadd.f32 0.0, %v657
        %v659 = vpop.f32.mrf.mxu0
        %660 = vmatprep.mubr.bf16.mxu0 0
        %661 = vmatmul.mubr.bf16.gmra.mxu0 %v595
        %v662 = vpop.f32.mrf.mxu0
        %v663 = vadd.f32 0.0, %v662
        %v664 = vpop.f32.mrf.mxu0
        %v665 = vpop.f32.mrf.mxu0
        %v666 = vadd.f32 0.0, %v665
        %v667 = vpop.f32.mrf.mxu0
        %668 = vmatprep.mubr.bf16.mxu0 0
        %669 = vmatmul.mubr.bf16.gmra.mxu0 %v598
        %v670 = vpop.f32.mrf.mxu0
        %v671 = vadd.f32 0.0, %v670
        %v672 = vpop.f32.mrf.mxu0
        %v673 = vpop.f32.mrf.mxu0
        %v674 = vadd.f32 0.0, %v673
        %v675 = vpop.f32.mrf.mxu0
        %676 = vdwg.mxu0
        %v677 = vsel %vm579, %v647, -1e+30
        %v678 = vsel %vm580, %v650, -1e+30
        %v679 = vsel %vm581, %v655, -1e+30
        %v680 = vsel %vm582, %v658, -1e+30
        %v681 = vsel %vm583, %v663, -1e+30
        %v682 = vsel %vm584, %v666, -1e+30
        %v683 = vsel %vm585, %v671, -1e+30
        %v684 = vsel %vm586, %v674, -1e+30
        %vm685 = vcmask 523264
        %v686 = vsel %vm685, %v677, -inf
        %687 = vmax.xlane.f32.xlu0 %v686
        %v688 = vpop.xlane.xlu0 %687
        %v689 = vsel %vm685, %v678, -inf
        %690 = vmax.xlane.f32.xlu0 %v689
        %v691 = vpop.xlane.xlu0 %690
        %v692 = vsel %vm685, %v679, -inf
        %693 = vmax.xlane.f32.xlu0 %v692
        %v694 = vpop.xlane.xlu0 %693
        %v695 = vsel %vm685, %v680, -inf
        %696 = vmax.xlane.f32.xlu0 %v695
        %v697 = vpop.xlane.xlu0 %696
        %v698 = vsel %vm685, %v681, -inf
        %699 = vmax.xlane.f32.xlu0 %v698
        %v700 = vpop.xlane.xlu0 %699
        %v701 = vsel %vm685, %v682, -inf
        %702 = vmax.xlane.f32.xlu0 %v701
        %v703 = vpop.xlane.xlu0 %702
        %v704 = vsel %vm685, %v683, -inf
        %705 = vmax.xlane.f32.xlu0 %v704
        %v706 = vpop.xlane.xlu0 %705
        %v707 = vsel %vm685, %v684, -inf
        %708 = vmax.xlane.f32.xlu0 %v707
        %v709 = vpop.xlane.xlu0 %708
        %v710 = vsub.f32 %v677, %v688
        %v711 = vsub.f32 %v678, %v691
        %v712 = vsub.f32 %v679, %v694
        %v713 = vsub.f32 %v680, %v697
        %v714 = vsub.f32 %v681, %v700
        %v715 = vsub.f32 %v682, %v703
        %v716 = vsub.f32 %v683, %v706
        %v717 = vsub.f32 %v684, %v709
        %v718 = vmul.f32 %v710, 1.442695
        %v719 = vpow.pop %v718
        %v720 = vmul.f32 %v711, 1.442695
        %v721 = vpow.pop %v720
        %v722 = vmul.f32 %v712, 1.442695
        %v723 = vpow.pop %v722
        %v724 = vmul.f32 %v713, 1.442695
        %v725 = vpow.pop %v724
        %v726 = vmul.f32 %v714, 1.442695
        %v727 = vpow.pop %v726
        %v728 = vmul.f32 %v715, 1.442695
        %v729 = vpow.pop %v728
        %v730 = vmul.f32 %v716, 1.442695
        %v731 = vpow.pop %v730
        %v732 = vmul.f32 %v717, 1.442695
        %v733 = vpow.pop %v732
        %v734 = vsel %vm685, %v719, 0.0
        %735 = vadd.xlane.f32.xlu0 %v734
        %v736 = vpop.xlane.xlu0 %735
        %v737 = vsel %vm685, %v721, 0.0
        %738 = vadd.xlane.f32.xlu0 %v737
        %v739 = vpop.xlane.xlu0 %738
        %v740 = vsel %vm685, %v723, 0.0
        %741 = vadd.xlane.f32.xlu0 %v740
        %v742 = vpop.xlane.xlu0 %741
        %v743 = vsel %vm685, %v725, 0.0
        %744 = vadd.xlane.f32.xlu0 %v743
        %v745 = vpop.xlane.xlu0 %744
        %v746 = vsel %vm685, %v727, 0.0
        %747 = vadd.xlane.f32.xlu0 %v746
        %v748 = vpop.xlane.xlu0 %747
        %v749 = vsel %vm685, %v729, 0.0
        %750 = vadd.xlane.f32.xlu0 %v749
        %v751 = vpop.xlane.xlu0 %750
        %v752 = vsel %vm685, %v731, 0.0
        %753 = vadd.xlane.f32.xlu0 %v752
        %v754 = vpop.xlane.xlu0 %753
        %v755 = vsel %vm685, %v733, 0.0
        %756 = vadd.xlane.f32.xlu0 %v755
        %v757 = vpop.xlane.xlu0 %756
        %v758 = vrcp.pop %v736
        %v759 = vrcp.pop %v739
        %v760 = vrcp.pop %v742
        %v761 = vrcp.pop %v745
        %v762 = vrcp.pop %v748
        %v763 = vrcp.pop %v751
        %v764 = vrcp.pop %v754
        %v765 = vrcp.pop %v757
        %v766 = vpack.c.bf16 %v721, %v719
        %v767 = vpack.c.bf16 %v725, %v723
        %v768 = vpack.c.bf16 %v729, %v727
        %v769 = vpack.c.bf16 %v733, %v731
        %v771 = vsel %vm685, %v766, 0
        %v774 = vsel %vm685, %v767, 0
        %v777 = vsel %vm685, %v768, 0
        %v780 = vsel %vm685, %v769, 0
        %782 = vmatprep.subr.bf16.mxu0 0
        %783 = vmatpush1.bf16.msra.mxu0 0
        %784 = vmatprep.subr.bf16.mxu0 0
        %785 = vmatpush1.bf16.msra.mxu0 0
        %786 = vmatprep.subr.bf16.mxu0 0
        %787 = vmatpush1.bf16.msra.mxu0 0
        %788 = vmatprep.subr.bf16.mxu0 0
        %789 = vmatpush1.bf16.msra.mxu0 0
        %790 = vmatprep.subr.bf16.mxu0 0
        %791 = vmatpush1.bf16.msra.mxu0 %v567
        %792 = vmatprep.subr.bf16.mxu0 0
        %793 = vmatpush1.bf16.msra.mxu0 %v564
        %794 = vmatprep.subr.bf16.mxu0 0
        %795 = vmatpush1.bf16.msra.mxu0 %v561
        %796 = vmatprep.subr.bf16.mxu0 0
        %797 = vmatpush1.bf16.msra.mxu0 %v558
        %798 = vmatprep.subr.bf16.mxu0 0
        %799 = vmatpush2.bf16.msra.mxu0 0
        %800 = vmatprep.subr.bf16.mxu0 0
        %801 = vmatpush2.bf16.msra.mxu0 0
        %802 = vmatprep.subr.bf16.mxu0 0
        %803 = vmatpush2.bf16.msra.mxu0 0
        %804 = vmatprep.subr.bf16.mxu0 0
        %805 = vmatpush2.bf16.msra.mxu0 0
        %806 = vmatprep.subr.bf16.mxu0 0
        %807 = vmatpush2.bf16.msra.mxu0 0
        %808 = vmatprep.subr.bf16.mxu0 0
        %809 = vmatpush2.bf16.msra.mxu0 0
        %810 = vmatprep.subr.bf16.mxu0 0
        %811 = vmatpush2.bf16.msra.mxu0 0
        %812 = vmatprep.subr.bf16.mxu0 0
        %813 = vmatpush2.bf16.msra.mxu0 0
        %814 = vmatprep.mubr.bf16.mxu0 0
        %815 = vmatmul.mubr.bf16.gmra.mxu0 %v771
        %v816 = vpop.f32.mrf.mxu0
        %v817 = vadd.f32 0.0, %v816
        %v818 = vpop.f32.mrf.mxu0
        %v819 = vpop.f32.mrf.mxu0
        %v820 = vadd.f32 0.0, %v819
        %v821 = vpop.f32.mrf.mxu0
        %822 = vmatprep.mubr.bf16.mxu0 0
        %823 = vmatmul.mubr.bf16.gmra.mxu0 %v774
        %v824 = vpop.f32.mrf.mxu0
        %v825 = vadd.f32 0.0, %v824
        %v826 = vpop.f32.mrf.mxu0
        %v827 = vpop.f32.mrf.mxu0
        %v828 = vadd.f32 0.0, %v827
        %v829 = vpop.f32.mrf.mxu0
        %830 = vmatprep.mubr.bf16.mxu0 0
        %831 = vmatmul.mubr.bf16.gmra.mxu0 %v777
        %v832 = vpop.f32.mrf.mxu0
        %v833 = vadd.f32 0.0, %v832
        %v834 = vpop.f32.mrf.mxu0
        %v835 = vpop.f32.mrf.mxu0
        %v836 = vadd.f32 0.0, %v835
        %v837 = vpop.f32.mrf.mxu0
        %838 = vmatprep.mubr.bf16.mxu0 0
        %839 = vmatmul.mubr.bf16.gmra.mxu0 %v780
        %v840 = vpop.f32.mrf.mxu0
        %v841 = vadd.f32 0.0, %v840
        %v842 = vpop.f32.mrf.mxu0
        %v843 = vpop.f32.mrf.mxu0
        %v844 = vadd.f32 0.0, %v843
        %v845 = vpop.f32.mrf.mxu0
        %846 = vdwg.mxu0
        %v847 = vmul.f32 %v817, %v758
        %v848 = vmul.f32 %v820, %v759
        %v849 = vmul.f32 %v825, %v760
        %v850 = vmul.f32 %v828, %v761
        %v851 = vmul.f32 %v833, %v762
        %v852 = vmul.f32 %v836, %v763
        %v853 = vmul.f32 %v841, %v764
        %v854 = vmul.f32 %v844, %v765
        %859 = vrot.lane.b32.xlu0 %v556, 96
        %v860 = vpop.permute.xlu0 %859
        %861 = vrot.lane.b32.xlu0 %v559, 96
        %v862 = vpop.permute.xlu0 %861
        %863 = vrot.lane.b32.xlu0 %v562, 96
        %v864 = vpop.permute.xlu0 %863
        %865 = vrot.lane.b32.xlu0 %v565, 96
        %v866 = vpop.permute.xlu0 %865
        %871 = vrot.lane.b32.xlu0 %v557, 96
        %v872 = vpop.permute.xlu0 %871
        %873 = vrot.lane.b32.xlu0 %v560, 96
        %v874 = vpop.permute.xlu0 %873
        %875 = vrot.lane.b32.xlu0 %v563, 96
        %v876 = vpop.permute.xlu0 %875
        %877 = vrot.lane.b32.xlu0 %v566, 96
        %v878 = vpop.permute.xlu0 %877
        %v880 = vsel %vm587, %v860, 0
        %v883 = vsel %vm587, %v862, 0
        %v886 = vsel %vm587, %v864, 0
        %v889 = vsel %vm587, %v866, 0
        %v892 = vsel %vm587, %v872, 0
        %v895 = vsel %vm587, %v874, 0
        %v898 = vsel %vm587, %v876, 0
        %v901 = vsel %vm587, %v878, 0
        %903 = vmatprep.subr.bf16.mxu0 0
        %904 = vmatpush1.bf16.xpose.msra.mxu0 0
        %905 = vmatprep.subr.bf16.mxu0 0
        %906 = vmatpush1.bf16.xpose.msra.mxu0 0
        %907 = vmatprep.subr.bf16.mxu0 0
        %908 = vmatpush1.bf16.xpose.msra.mxu0 0
        %909 = vmatprep.subr.bf16.mxu0 0
        %910 = vmatpush1.bf16.xpose.msra.mxu0 0
        %911 = vmatprep.subr.bf16.mxu0 0
        %912 = vmatpush1.bf16.xpose.msra.mxu0 %v901
        %913 = vmatprep.subr.bf16.mxu0 0
        %914 = vmatpush1.bf16.xpose.msra.mxu0 %v898
        %915 = vmatprep.subr.bf16.mxu0 0
        %916 = vmatpush1.bf16.xpose.msra.mxu0 %v895
        %917 = vmatprep.subr.bf16.mxu0 0
        %918 = vmatpush1.bf16.xpose.msra.mxu0 %v892
        %919 = vmatprep.subr.bf16.mxu0 0
        %920 = vmatpush2.bf16.xpose.msra.mxu0 0
        %921 = vmatprep.subr.bf16.mxu0 0
        %922 = vmatpush2.bf16.xpose.msra.mxu0 0
        %923 = vmatprep.subr.bf16.mxu0 0
        %924 = vmatpush2.bf16.xpose.msra.mxu0 0
        %925 = vmatprep.subr.bf16.mxu0 0
        %926 = vmatpush2.bf16.xpose.msra.mxu0 0
        %927 = vmatprep.subr.bf16.mxu0 0
        %928 = vmatpush2.bf16.xpose.msra.mxu0 0
        %929 = vmatprep.subr.bf16.mxu0 0
        %930 = vmatpush2.bf16.xpose.msra.mxu0 0
        %931 = vmatprep.subr.bf16.mxu0 0
        %932 = vmatpush2.bf16.xpose.msra.mxu0 0
        %933 = vmatprep.subr.bf16.mxu0 0
        %934 = vmatpush2.bf16.xpose.msra.mxu0 0
        %935 = vmatprep.mubr.bf16.mxu0 0
        %936 = vmatmul.mubr.bf16.gmra.mxu0 %v880
        %v937 = vpop.f32.mrf.mxu0
        %v938 = vadd.f32 0.0, %v937
        %v939 = vpop.f32.mrf.mxu0
        %v940 = vpop.f32.mrf.mxu0
        %v941 = vadd.f32 0.0, %v940
        %v942 = vpop.f32.mrf.mxu0
        %943 = vmatprep.mubr.bf16.mxu0 0
        %944 = vmatmul.mubr.bf16.gmra.mxu0 %v883
        %v945 = vpop.f32.mrf.mxu0
        %v946 = vadd.f32 0.0, %v945
        %v947 = vpop.f32.mrf.mxu0
        %v948 = vpop.f32.mrf.mxu0
        %v949 = vadd.f32 0.0, %v948
        %v950 = vpop.f32.mrf.mxu0
        %951 = vmatprep.mubr.bf16.mxu0 0
        %952 = vmatmul.mubr.bf16.gmra.mxu0 %v886
        %v953 = vpop.f32.mrf.mxu0
        %v954 = vadd.f32 0.0, %v953
        %v955 = vpop.f32.mrf.mxu0
        %v956 = vpop.f32.mrf.mxu0
        %v957 = vadd.f32 0.0, %v956
        %v958 = vpop.f32.mrf.mxu0
        %959 = vmatprep.mubr.bf16.mxu0 0
        %960 = vmatmul.mubr.bf16.gmra.mxu0 %v889
        %v961 = vpop.f32.mrf.mxu0
        %v962 = vadd.f32 0.0, %v961
        %v963 = vpop.f32.mrf.mxu0
        %v964 = vpop.f32.mrf.mxu0
        %v965 = vadd.f32 0.0, %v964
        %v966 = vpop.f32.mrf.mxu0
        %967 = vdwg.mxu0
        %v968 = vsel %vm579, %v938, -1e+30
        %v969 = vsel %vm580, %v941, -1e+30
        %v970 = vsel %vm581, %v946, -1e+30
        %v971 = vsel %vm582, %v949, -1e+30
        %v972 = vsel %vm583, %v954, -1e+30
        %v973 = vsel %vm584, %v957, -1e+30
        %v974 = vsel %vm585, %v962, -1e+30
        %v975 = vsel %vm586, %v965, -1e+30
        %v976 = vsel %vm685, %v968, -inf
        %977 = vmax.xlane.f32.xlu0 %v976
        %v978 = vpop.xlane.xlu0 %977
        %v979 = vsel %vm685, %v969, -inf
        %980 = vmax.xlane.f32.xlu0 %v979
        %v981 = vpop.xlane.xlu0 %980
        %v982 = vsel %vm685, %v970, -inf
        %983 = vmax.xlane.f32.xlu0 %v982
        %v984 = vpop.xlane.xlu0 %983
        %v985 = vsel %vm685, %v971, -inf
        %986 = vmax.xlane.f32.xlu0 %v985
        %v987 = vpop.xlane.xlu0 %986
        %v988 = vsel %vm685, %v972, -inf
        %989 = vmax.xlane.f32.xlu0 %v988
        %v990 = vpop.xlane.xlu0 %989
        %v991 = vsel %vm685, %v973, -inf
        %992 = vmax.xlane.f32.xlu0 %v991
        %v993 = vpop.xlane.xlu0 %992
        %v994 = vsel %vm685, %v974, -inf
        %995 = vmax.xlane.f32.xlu0 %v994
        %v996 = vpop.xlane.xlu0 %995
        %v997 = vsel %vm685, %v975, -inf
        %998 = vmax.xlane.f32.xlu0 %v997
        %v999 = vpop.xlane.xlu0 %998
        %v1000 = vsub.f32 %v968, %v978
        %v1001 = vsub.f32 %v969, %v981
        %v1002 = vsub.f32 %v970, %v984
        %v1003 = vsub.f32 %v971, %v987
        %v1004 = vsub.f32 %v972, %v990
        %v1005 = vsub.f32 %v973, %v993
        %v1006 = vsub.f32 %v974, %v996
        %v1007 = vsub.f32 %v975, %v999
        %v1008 = vmul.f32 %v1000, 1.442695
        %v1009 = vpow.pop %v1008
        %v1010 = vmul.f32 %v1001, 1.442695
        %v1011 = vpow.pop %v1010
        %v1012 = vmul.f32 %v1002, 1.442695
        %v1013 = vpow.pop %v1012
        %v1014 = vmul.f32 %v1003, 1.442695
        %v1015 = vpow.pop %v1014
        %v1016 = vmul.f32 %v1004, 1.442695
        %v1017 = vpow.pop %v1016
        %v1018 = vmul.f32 %v1005, 1.442695
        %v1019 = vpow.pop %v1018
        %v1020 = vmul.f32 %v1006, 1.442695
        %v1021 = vpow.pop %v1020
        %v1022 = vmul.f32 %v1007, 1.442695
        %v1023 = vpow.pop %v1022
        %v1024 = vsel %vm685, %v1009, 0.0
        %1025 = vadd.xlane.f32.xlu0 %v1024
        %v1026 = vpop.xlane.xlu0 %1025
        %v1027 = vsel %vm685, %v1011, 0.0
        %1028 = vadd.xlane.f32.xlu0 %v1027
        %v1029 = vpop.xlane.xlu0 %1028
        %v1030 = vsel %vm685, %v1013, 0.0
        %1031 = vadd.xlane.f32.xlu0 %v1030
        %v1032 = vpop.xlane.xlu0 %1031
        %v1033 = vsel %vm685, %v1015, 0.0
        %1034 = vadd.xlane.f32.xlu0 %v1033
        %v1035 = vpop.xlane.xlu0 %1034
        %v1036 = vsel %vm685, %v1017, 0.0
        %1037 = vadd.xlane.f32.xlu0 %v1036
        %v1038 = vpop.xlane.xlu0 %1037
        %v1039 = vsel %vm685, %v1019, 0.0
        %1040 = vadd.xlane.f32.xlu0 %v1039
        %v1041 = vpop.xlane.xlu0 %1040
        %v1042 = vsel %vm685, %v1021, 0.0
        %1043 = vadd.xlane.f32.xlu0 %v1042
        %v1044 = vpop.xlane.xlu0 %1043
        %v1045 = vsel %vm685, %v1023, 0.0
        %1046 = vadd.xlane.f32.xlu0 %v1045
        %v1047 = vpop.xlane.xlu0 %1046
        %v1048 = vrcp.pop %v1026
        %v1049 = vrcp.pop %v1029
        %v1050 = vrcp.pop %v1032
        %v1051 = vrcp.pop %v1035
        %v1052 = vrcp.pop %v1038
        %v1053 = vrcp.pop %v1041
        %v1054 = vrcp.pop %v1044
        %v1055 = vrcp.pop %v1047
        %v1056 = vpack.c.bf16 %v1011, %v1009
        %v1057 = vpack.c.bf16 %v1015, %v1013
        %v1058 = vpack.c.bf16 %v1019, %v1017
        %v1059 = vpack.c.bf16 %v1023, %v1021
        %1064 = vrot.lane.b32.xlu0 %v558, 96
        %v1065 = vpop.permute.xlu0 %1064
        %1066 = vrot.lane.b32.xlu0 %v561, 96
        %v1067 = vpop.permute.xlu0 %1066
        %1068 = vrot.lane.b32.xlu0 %v564, 96
        %v1069 = vpop.permute.xlu0 %1068
        %1070 = vrot.lane.b32.xlu0 %v567, 96
        %v1071 = vpop.permute.xlu0 %1070
        %v1077 = vsel %vm685, %v1056, 0
        %v1080 = vsel %vm685, %v1057, 0
        %v1083 = vsel %vm685, %v1058, 0
        %v1086 = vsel %vm685, %v1059, 0
        %1088 = vmatprep.subr.bf16.mxu0 0
        %1089 = vmatpush1.bf16.msra.mxu0 0
        %1090 = vmatprep.subr.bf16.mxu0 0
        %1091 = vmatpush1.bf16.msra.mxu0 0
        %1092 = vmatprep.subr.bf16.mxu0 0
        %1093 = vmatpush1.bf16.msra.mxu0 0
        %1094 = vmatprep.subr.bf16.mxu0 0
        %1095 = vmatpush1.bf16.msra.mxu0 0
        %1096 = vmatprep.subr.bf16.mxu0 0
        %1097 = vmatpush1.bf16.msra.mxu0 %v1071
        %1098 = vmatprep.subr.bf16.mxu0 0
        %1099 = vmatpush1.bf16.msra.mxu0 %v1069
        %1100 = vmatprep.subr.bf16.mxu0 0
        %1101 = vmatpush1.bf16.msra.mxu0 %v1067
        %1102 = vmatprep.subr.bf16.mxu0 0
        %1103 = vmatpush1.bf16.msra.mxu0 %v1065
        %1104 = vmatprep.subr.bf16.mxu0 0
        %1105 = vmatpush2.bf16.msra.mxu0 0
        %1106 = vmatprep.subr.bf16.mxu0 0
        %1107 = vmatpush2.bf16.msra.mxu0 0
        %1108 = vmatprep.subr.bf16.mxu0 0
        %1109 = vmatpush2.bf16.msra.mxu0 0
        %1110 = vmatprep.subr.bf16.mxu0 0
        %1111 = vmatpush2.bf16.msra.mxu0 0
        %1112 = vmatprep.subr.bf16.mxu0 0
        %1113 = vmatpush2.bf16.msra.mxu0 0
        %1114 = vmatprep.subr.bf16.mxu0 0
        %1115 = vmatpush2.bf16.msra.mxu0 0
        %1116 = vmatprep.subr.bf16.mxu0 0
        %1117 = vmatpush2.bf16.msra.mxu0 0
        %1118 = vmatprep.subr.bf16.mxu0 0
        %1119 = vmatpush2.bf16.msra.mxu0 0
        %1120 = vmatprep.mubr.bf16.mxu0 0
        %1121 = vmatmul.mubr.bf16.gmra.mxu0 %v1077
        %v1122 = vpop.f32.mrf.mxu0
        %v1123 = vadd.f32 0.0, %v1122
        %v1124 = vpop.f32.mrf.mxu0
        %v1125 = vpop.f32.mrf.mxu0
        %v1126 = vadd.f32 0.0, %v1125
        %v1127 = vpop.f32.mrf.mxu0
        %1128 = vmatprep.mubr.bf16.mxu0 0
        %1129 = vmatmul.mubr.bf16.gmra.mxu0 %v1080
        %v1130 = vpop.f32.mrf.mxu0
        %v1131 = vadd.f32 0.0, %v1130
        %v1132 = vpop.f32.mrf.mxu0
        %v1133 = vpop.f32.mrf.mxu0
        %v1134 = vadd.f32 0.0, %v1133
        %v1135 = vpop.f32.mrf.mxu0
        %1136 = vmatprep.mubr.bf16.mxu0 0
        %1137 = vmatmul.mubr.bf16.gmra.mxu0 %v1083
        %v1138 = vpop.f32.mrf.mxu0
        %v1139 = vadd.f32 0.0, %v1138
        %v1140 = vpop.f32.mrf.mxu0
        %v1141 = vpop.f32.mrf.mxu0
        %v1142 = vadd.f32 0.0, %v1141
        %v1143 = vpop.f32.mrf.mxu0
        %1144 = vmatprep.mubr.bf16.mxu0 0
        %1145 = vmatmul.mubr.bf16.gmra.mxu0 %v1086
        %v1146 = vpop.f32.mrf.mxu0
        %v1147 = vadd.f32 0.0, %v1146
        %v1148 = vpop.f32.mrf.mxu0
        %v1149 = vpop.f32.mrf.mxu0
        %v1150 = vadd.f32 0.0, %v1149
        %v1151 = vpop.f32.mrf.mxu0
        %1152 = vdwg.mxu0
        %v1153 = vmul.f32 %v1123, %v1048
        %v1154 = vmul.f32 %v1126, %v1049
        %v1155 = vmul.f32 %v1131, %v1050
        %v1156 = vmul.f32 %v1134, %v1051
        %v1157 = vmul.f32 %v1139, %v1052
        %v1158 = vmul.f32 %v1142, %v1053
        %v1159 = vmul.f32 %v1147, %v1054
        %v1160 = vmul.f32 %v1150, %v1055
        %1161 = vrot.lane.b32.xlu0 %v556, 64
        %v1162 = vpop.permute.xlu0 %1161
        %1163 = vrot.lane.b32.xlu0 %v559, 64
        %v1164 = vpop.permute.xlu0 %1163
        %1165 = vrot.lane.b32.xlu0 %v562, 64
        %v1166 = vpop.permute.xlu0 %1165
        %1167 = vrot.lane.b32.xlu0 %v565, 64
        %v1168 = vpop.permute.xlu0 %1167
        %1169 = vrot.lane.b32.xlu0 %v557, 64
        %v1170 = vpop.permute.xlu0 %1169
        %1171 = vrot.lane.b32.xlu0 %v560, 64
        %v1172 = vpop.permute.xlu0 %1171
        %1173 = vrot.lane.b32.xlu0 %v563, 64
        %v1174 = vpop.permute.xlu0 %1173
        %1175 = vrot.lane.b32.xlu0 %v566, 64
        %v1176 = vpop.permute.xlu0 %1175
        %v1178 = vsel %vm587, %v1162, 0
        %v1181 = vsel %vm587, %v1164, 0
        %v1184 = vsel %vm587, %v1166, 0
        %v1187 = vsel %vm587, %v1168, 0
        %v1190 = vsel %vm587, %v1170, 0
        %v1193 = vsel %vm587, %v1172, 0
        %v1196 = vsel %vm587, %v1174, 0
        %v1199 = vsel %vm587, %v1176, 0
        %1201 = vmatprep.subr.bf16.mxu0 0
        %1202 = vmatpush1.bf16.xpose.msra.mxu0 0
        %1203 = vmatprep.subr.bf16.mxu0 0
        %1204 = vmatpush1.bf16.xpose.msra.mxu0 0
        %1205 = vmatprep.subr.bf16.mxu0 0
        %1206 = vmatpush1.bf16.xpose.msra.mxu0 0
        %1207 = vmatprep.subr.bf16.mxu0 0
        %1208 = vmatpush1.bf16.xpose.msra.mxu0 0
        %1209 = vmatprep.subr.bf16.mxu0 0
        %1210 = vmatpush1.bf16.xpose.msra.mxu0 %v1199
        %1211 = vmatprep.subr.bf16.mxu0 0
        %1212 = vmatpush1.bf16.xpose.msra.mxu0 %v1196
        %1213 = vmatprep.subr.bf16.mxu0 0
        %1214 = vmatpush1.bf16.xpose.msra.mxu0 %v1193
        %1215 = vmatprep.subr.bf16.mxu0 0
        %1216 = vmatpush1.bf16.xpose.msra.mxu0 %v1190
        %1217 = vmatprep.subr.bf16.mxu0 0
        %1218 = vmatpush2.bf16.xpose.msra.mxu0 0
        %1219 = vmatprep.subr.bf16.mxu0 0
        %1220 = vmatpush2.bf16.xpose.msra.mxu0 0
        %1221 = vmatprep.subr.bf16.mxu0 0
        %1222 = vmatpush2.bf16.xpose.msra.mxu0 0
        %1223 = vmatprep.subr.bf16.mxu0 0
        %1224 = vmatpush2.bf16.xpose.msra.mxu0 0
        %1225 = vmatprep.subr.bf16.mxu0 0
        %1226 = vmatpush2.bf16.xpose.msra.mxu0 0
        %1227 = vmatprep.subr.bf16.mxu0 0
        %1228 = vmatpush2.bf16.xpose.msra.mxu0 0
        %1229 = vmatprep.subr.bf16.mxu0 0
        %1230 = vmatpush2.bf16.xpose.msra.mxu0 0
        %1231 = vmatprep.subr.bf16.mxu0 0
        %1232 = vmatpush2.bf16.xpose.msra.mxu0 0
        %1233 = vmatprep.mubr.bf16.mxu0 0
        %1234 = vmatmul.mubr.bf16.gmra.mxu0 %v1178
        %v1235 = vpop.f32.mrf.mxu0
        %v1236 = vadd.f32 0.0, %v1235
        %v1237 = vpop.f32.mrf.mxu0
        %v1238 = vpop.f32.mrf.mxu0
        %v1239 = vadd.f32 0.0, %v1238
        %v1240 = vpop.f32.mrf.mxu0
        %1241 = vmatprep.mubr.bf16.mxu0 0
        %1242 = vmatmul.mubr.bf16.gmra.mxu0 %v1181
        %v1243 = vpop.f32.mrf.mxu0
        %v1244 = vadd.f32 0.0, %v1243
        %v1245 = vpop.f32.mrf.mxu0
        %v1246 = vpop.f32.mrf.mxu0
        %v1247 = vadd.f32 0.0, %v1246
        %v1248 = vpop.f32.mrf.mxu0
        %1249 = vmatprep.mubr.bf16.mxu0 0
        %1250 = vmatmul.mubr.bf16.gmra.mxu0 %v1184
        %v1251 = vpop.f32.mrf.mxu0
        %v1252 = vadd.f32 0.0, %v1251
        %v1253 = vpop.f32.mrf.mxu0
        %v1254 = vpop.f32.mrf.mxu0
        %v1255 = vadd.f32 0.0, %v1254
        %v1256 = vpop.f32.mrf.mxu0
        %1257 = vmatprep.mubr.bf16.mxu0 0
        %1258 = vmatmul.mubr.bf16.gmra.mxu0 %v1187
        %v1259 = vpop.f32.mrf.mxu0
        %v1260 = vadd.f32 0.0, %v1259
        %v1261 = vpop.f32.mrf.mxu0
        %v1262 = vpop.f32.mrf.mxu0
        %v1263 = vadd.f32 0.0, %v1262
        %v1264 = vpop.f32.mrf.mxu0
        %1265 = vdwg.mxu0
        %v1266 = vsel %vm579, %v1236, -1e+30
        %v1267 = vsel %vm580, %v1239, -1e+30
        %v1268 = vsel %vm581, %v1244, -1e+30
        %v1269 = vsel %vm582, %v1247, -1e+30
        %v1270 = vsel %vm583, %v1252, -1e+30
        %v1271 = vsel %vm584, %v1255, -1e+30
        %v1272 = vsel %vm585, %v1260, -1e+30
        %v1273 = vsel %vm586, %v1263, -1e+30
        %v1274 = vsel %vm685, %v1266, -inf
        %1275 = vmax.xlane.f32.xlu0 %v1274
        %v1276 = vpop.xlane.xlu0 %1275
        %v1277 = vsel %vm685, %v1267, -inf
        %1278 = vmax.xlane.f32.xlu0 %v1277
        %v1279 = vpop.xlane.xlu0 %1278
        %v1280 = vsel %vm685, %v1268, -inf
        %1281 = vmax.xlane.f32.xlu0 %v1280
        %v1282 = vpop.xlane.xlu0 %1281
        %v1283 = vsel %vm685, %v1269, -inf
        %1284 = vmax.xlane.f32.xlu0 %v1283
        %v1285 = vpop.xlane.xlu0 %1284
        %v1286 = vsel %vm685, %v1270, -inf
        %1287 = vmax.xlane.f32.xlu0 %v1286
        %v1288 = vpop.xlane.xlu0 %1287
        %v1289 = vsel %vm685, %v1271, -inf
        %1290 = vmax.xlane.f32.xlu0 %v1289
        %v1291 = vpop.xlane.xlu0 %1290
        %v1292 = vsel %vm685, %v1272, -inf
        %1293 = vmax.xlane.f32.xlu0 %v1292
        %v1294 = vpop.xlane.xlu0 %1293
        %v1295 = vsel %vm685, %v1273, -inf
        %1296 = vmax.xlane.f32.xlu0 %v1295
        %v1297 = vpop.xlane.xlu0 %1296
        %v1298 = vsub.f32 %v1266, %v1276
        %v1299 = vsub.f32 %v1267, %v1279
        %v1300 = vsub.f32 %v1268, %v1282
        %v1301 = vsub.f32 %v1269, %v1285
        %v1302 = vsub.f32 %v1270, %v1288
        %v1303 = vsub.f32 %v1271, %v1291
        %v1304 = vsub.f32 %v1272, %v1294
        %v1305 = vsub.f32 %v1273, %v1297
        %v1306 = vmul.f32 %v1298, 1.442695
        %v1307 = vpow.pop %v1306
        %v1308 = vmul.f32 %v1299, 1.442695
        %v1309 = vpow.pop %v1308
        %v1310 = vmul.f32 %v1300, 1.442695
        %v1311 = vpow.pop %v1310
        %v1312 = vmul.f32 %v1301, 1.442695
        %v1313 = vpow.pop %v1312
        %v1314 = vmul.f32 %v1302, 1.442695
        %v1315 = vpow.pop %v1314
        %v1316 = vmul.f32 %v1303, 1.442695
        %v1317 = vpow.pop %v1316
        %v1318 = vmul.f32 %v1304, 1.442695
        %v1319 = vpow.pop %v1318
        %v1320 = vmul.f32 %v1305, 1.442695
        %v1321 = vpow.pop %v1320
        %v1322 = vsel %vm685, %v1307, 0.0
        %1323 = vadd.xlane.f32.xlu0 %v1322
        %v1324 = vpop.xlane.xlu0 %1323
        %v1325 = vsel %vm685, %v1309, 0.0
        %1326 = vadd.xlane.f32.xlu0 %v1325
        %v1327 = vpop.xlane.xlu0 %1326
        %v1328 = vsel %vm685, %v1311, 0.0
        %1329 = vadd.xlane.f32.xlu0 %v1328
        %v1330 = vpop.xlane.xlu0 %1329
        %v1331 = vsel %vm685, %v1313, 0.0
        %1332 = vadd.xlane.f32.xlu0 %v1331
        %v1333 = vpop.xlane.xlu0 %1332
        %v1334 = vsel %vm685, %v1315, 0.0
        %1335 = vadd.xlane.f32.xlu0 %v1334
        %v1336 = vpop.xlane.xlu0 %1335
        %v1337 = vsel %vm685, %v1317, 0.0
        %1338 = vadd.xlane.f32.xlu0 %v1337
        %v1339 = vpop.xlane.xlu0 %1338
        %v1340 = vsel %vm685, %v1319, 0.0
        %1341 = vadd.xlane.f32.xlu0 %v1340
        %v1342 = vpop.xlane.xlu0 %1341
        %v1343 = vsel %vm685, %v1321, 0.0
        %1344 = vadd.xlane.f32.xlu0 %v1343
        %v1345 = vpop.xlane.xlu0 %1344
        %v1346 = vrcp.pop %v1324
        %v1347 = vrcp.pop %v1327
        %v1348 = vrcp.pop %v1330
        %v1349 = vrcp.pop %v1333
        %v1350 = vrcp.pop %v1336
        %v1351 = vrcp.pop %v1339
        %v1352 = vrcp.pop %v1342
        %v1353 = vrcp.pop %v1345
        %v1354 = vpack.c.bf16 %v1309, %v1307
        %v1355 = vpack.c.bf16 %v1313, %v1311
        %v1356 = vpack.c.bf16 %v1317, %v1315
        %v1357 = vpack.c.bf16 %v1321, %v1319
        %1358 = vrot.lane.b32.xlu0 %v558, 64
        %v1359 = vpop.permute.xlu0 %1358
        %1360 = vrot.lane.b32.xlu0 %v561, 64
        %v1361 = vpop.permute.xlu0 %1360
        %1362 = vrot.lane.b32.xlu0 %v564, 64
        %v1363 = vpop.permute.xlu0 %1362
        %1364 = vrot.lane.b32.xlu0 %v567, 64
        %v1365 = vpop.permute.xlu0 %1364
        %v1371 = vsel %vm685, %v1354, 0
        %v1374 = vsel %vm685, %v1355, 0
        %v1377 = vsel %vm685, %v1356, 0
        %v1380 = vsel %vm685, %v1357, 0
        %1382 = vmatprep.subr.bf16.mxu0 0
        %1383 = vmatpush1.bf16.msra.mxu0 0
        %1384 = vmatprep.subr.bf16.mxu0 0
        %1385 = vmatpush1.bf16.msra.mxu0 0
        %1386 = vmatprep.subr.bf16.mxu0 0
        %1387 = vmatpush1.bf16.msra.mxu0 0
        %1388 = vmatprep.subr.bf16.mxu0 0
        %1389 = vmatpush1.bf16.msra.mxu0 0
        %1390 = vmatprep.subr.bf16.mxu0 0
        %1391 = vmatpush1.bf16.msra.mxu0 %v1365
        %1392 = vmatprep.subr.bf16.mxu0 0
        %1393 = vmatpush1.bf16.msra.mxu0 %v1363
        %1394 = vmatprep.subr.bf16.mxu0 0
        %1395 = vmatpush1.bf16.msra.mxu0 %v1361
        %1396 = vmatprep.subr.bf16.mxu0 0
        %1397 = vmatpush1.bf16.msra.mxu0 %v1359
        %1398 = vmatprep.subr.bf16.mxu0 0
        %1399 = vmatpush2.bf16.msra.mxu0 0
        %1400 = vmatprep.subr.bf16.mxu0 0
        %1401 = vmatpush2.bf16.msra.mxu0 0
        %1402 = vmatprep.subr.bf16.mxu0 0
        %1403 = vmatpush2.bf16.msra.mxu0 0
        %1404 = vmatprep.subr.bf16.mxu0 0
        %1405 = vmatpush2.bf16.msra.mxu0 0
        %1406 = vmatprep.subr.bf16.mxu0 0
        %1407 = vmatpush2.bf16.msra.mxu0 0
        %1408 = vmatprep.subr.bf16.mxu0 0
        %1409 = vmatpush2.bf16.msra.mxu0 0
        %1410 = vmatprep.subr.bf16.mxu0 0
        %1411 = vmatpush2.bf16.msra.mxu0 0
        %1412 = vmatprep.subr.bf16.mxu0 0
        %1413 = vmatpush2.bf16.msra.mxu0 0
        %1414 = vmatprep.mubr.bf16.mxu0 0
        %1415 = vmatmul.mubr.bf16.gmra.mxu0 %v1371
        %v1416 = vpop.f32.mrf.mxu0
        %v1417 = vadd.f32 0.0, %v1416
        %v1418 = vpop.f32.mrf.mxu0
        %v1419 = vpop.f32.mrf.mxu0
        %v1420 = vadd.f32 0.0, %v1419
        %v1421 = vpop.f32.mrf.mxu0
        %1422 = vmatprep.mubr.bf16.mxu0 0
        %1423 = vmatmul.mubr.bf16.gmra.mxu0 %v1374
        %v1424 = vpop.f32.mrf.mxu0
        %v1425 = vadd.f32 0.0, %v1424
        %v1426 = vpop.f32.mrf.mxu0
        %v1427 = vpop.f32.mrf.mxu0
        %v1428 = vadd.f32 0.0, %v1427
        %v1429 = vpop.f32.mrf.mxu0
        %1430 = vmatprep.mubr.bf16.mxu0 0
        %1431 = vmatmul.mubr.bf16.gmra.mxu0 %v1377
        %v1432 = vpop.f32.mrf.mxu0
        %v1433 = vadd.f32 0.0, %v1432
        %v1434 = vpop.f32.mrf.mxu0
        %v1435 = vpop.f32.mrf.mxu0
        %v1436 = vadd.f32 0.0, %v1435
        %v1437 = vpop.f32.mrf.mxu0
        %1438 = vmatprep.mubr.bf16.mxu0 0
        %1439 = vmatmul.mubr.bf16.gmra.mxu0 %v1380
        %v1440 = vpop.f32.mrf.mxu0
        %v1441 = vadd.f32 0.0, %v1440
        %v1442 = vpop.f32.mrf.mxu0
        %v1443 = vpop.f32.mrf.mxu0
        %v1444 = vadd.f32 0.0, %v1443
        %v1445 = vpop.f32.mrf.mxu0
        %1446 = vdwg.mxu0
        %v1447 = vmul.f32 %v1417, %v1346
        %v1448 = vmul.f32 %v1420, %v1347
        %v1449 = vmul.f32 %v1425, %v1348
        %v1450 = vmul.f32 %v1428, %v1349
        %v1451 = vmul.f32 %v1433, %v1350
        %v1452 = vmul.f32 %v1436, %v1351
        %v1453 = vmul.f32 %v1441, %v1352
        %v1454 = vmul.f32 %v1444, %v1353
        %1455 = vrot.lane.b32.xlu0 %v556, 32
        %v1456 = vpop.permute.xlu0 %1455
        %1457 = vrot.lane.b32.xlu0 %v559, 32
        %v1458 = vpop.permute.xlu0 %1457
        %1459 = vrot.lane.b32.xlu0 %v562, 32
        %v1460 = vpop.permute.xlu0 %1459
        %1461 = vrot.lane.b32.xlu0 %v565, 32
        %v1462 = vpop.permute.xlu0 %1461
        %1463 = vrot.lane.b32.xlu0 %v557, 32
        %v1464 = vpop.permute.xlu0 %1463
        %1465 = vrot.lane.b32.xlu0 %v560, 32
        %v1466 = vpop.permute.xlu0 %1465
        %1467 = vrot.lane.b32.xlu0 %v563, 32
        %v1468 = vpop.permute.xlu0 %1467
        %1469 = vrot.lane.b32.xlu0 %v566, 32
        %v1470 = vpop.permute.xlu0 %1469
        %v1472 = vsel %vm587, %v1456, 0
        %v1475 = vsel %vm587, %v1458, 0
        %v1478 = vsel %vm587, %v1460, 0
        %v1481 = vsel %vm587, %v1462, 0
        %v1484 = vsel %vm587, %v1464, 0
        %v1487 = vsel %vm587, %v1466, 0
        %v1490 = vsel %vm587, %v1468, 0
        %v1493 = vsel %vm587, %v1470, 0
        %1495 = vmatprep.subr.bf16.mxu0 0
        %1496 = vmatpush1.bf16.xpose.msra.mxu0 0
        %1497 = vmatprep.subr.bf16.mxu0 0
        %1498 = vmatpush1.bf16.xpose.msra.mxu0 0
        %1499 = vmatprep.subr.bf16.mxu0 0
        %1500 = vmatpush1.bf16.xpose.msra.mxu0 0
        %1501 = vmatprep.subr.bf16.mxu0 0
        %1502 = vmatpush1.bf16.xpose.msra.mxu0 0
        %1503 = vmatprep.subr.bf16.mxu0 0
        %1504 = vmatpush1.bf16.xpose.msra.mxu0 %v1493
        %1505 = vmatprep.subr.bf16.mxu0 0
        %1506 = vmatpush1.bf16.xpose.msra.mxu0 %v1490
        %1507 = vmatprep.subr.bf16.mxu0 0
        %1508 = vmatpush1.bf16.xpose.msra.mxu0 %v1487
        %1509 = vmatprep.subr.bf16.mxu0 0
        %1510 = vmatpush1.bf16.xpose.msra.mxu0 %v1484
        %1511 = vmatprep.subr.bf16.mxu0 0
        %1512 = vmatpush2.bf16.xpose.msra.mxu0 0
        %1513 = vmatprep.subr.bf16.mxu0 0
        %1514 = vmatpush2.bf16.xpose.msra.mxu0 0
        %1515 = vmatprep.subr.bf16.mxu0 0
        %1516 = vmatpush2.bf16.xpose.msra.mxu0 0
        %1517 = vmatprep.subr.bf16.mxu0 0
        %1518 = vmatpush2.bf16.xpose.msra.mxu0 0
        %1519 = vmatprep.subr.bf16.mxu0 0
        %1520 = vmatpush2.bf16.xpose.msra.mxu0 0
        %1521 = vmatprep.subr.bf16.mxu0 0
        %1522 = vmatpush2.bf16.xpose.msra.mxu0 0
        %1523 = vmatprep.subr.bf16.mxu0 0
        %1524 = vmatpush2.bf16.xpose.msra.mxu0 0
        %1525 = vmatprep.subr.bf16.mxu0 0
        %1526 = vmatpush2.bf16.xpose.msra.mxu0 0
        %1527 = vmatprep.mubr.bf16.mxu0 0
        %1528 = vmatmul.mubr.bf16.gmra.mxu0 %v1472
        %v1529 = vpop.f32.mrf.mxu0
        %v1530 = vadd.f32 0.0, %v1529
        %v1531 = vpop.f32.mrf.mxu0
        %v1532 = vpop.f32.mrf.mxu0
        %v1533 = vadd.f32 0.0, %v1532
        %v1534 = vpop.f32.mrf.mxu0
        %1535 = vmatprep.mubr.bf16.mxu0 0
        %1536 = vmatmul.mubr.bf16.gmra.mxu0 %v1475
        %v1537 = vpop.f32.mrf.mxu0
        %v1538 = vadd.f32 0.0, %v1537
        %v1539 = vpop.f32.mrf.mxu0
        %v1540 = vpop.f32.mrf.mxu0
        %v1541 = vadd.f32 0.0, %v1540
        %v1542 = vpop.f32.mrf.mxu0
        %1543 = vmatprep.mubr.bf16.mxu0 0
        %1544 = vmatmul.mubr.bf16.gmra.mxu0 %v1478
        %v1545 = vpop.f32.mrf.mxu0
        %v1546 = vadd.f32 0.0, %v1545
        %v1547 = vpop.f32.mrf.mxu0
        %v1548 = vpop.f32.mrf.mxu0
        %v1549 = vadd.f32 0.0, %v1548
        %v1550 = vpop.f32.mrf.mxu0
        %1551 = vmatprep.mubr.bf16.mxu0 0
        %1552 = vmatmul.mubr.bf16.gmra.mxu0 %v1481
        %v1553 = vpop.f32.mrf.mxu0
        %v1554 = vadd.f32 0.0, %v1553
        %v1555 = vpop.f32.mrf.mxu0
        %v1556 = vpop.f32.mrf.mxu0
        %v1557 = vadd.f32 0.0, %v1556
        %v1558 = vpop.f32.mrf.mxu0
        %1559 = vdwg.mxu0
        %v1560 = vsel %vm579, %v1530, -1e+30
        %v1561 = vsel %vm580, %v1533, -1e+30
        %v1562 = vsel %vm581, %v1538, -1e+30
        %v1563 = vsel %vm582, %v1541, -1e+30
        %v1564 = vsel %vm583, %v1546, -1e+30
        %v1565 = vsel %vm584, %v1549, -1e+30
        %v1566 = vsel %vm585, %v1554, -1e+30
        %v1567 = vsel %vm586, %v1557, -1e+30
        %v1568 = vsel %vm685, %v1560, -inf
        %1569 = vmax.xlane.f32.xlu0 %v1568
        %v1570 = vpop.xlane.xlu0 %1569
        %v1571 = vsel %vm685, %v1561, -inf
        %1572 = vmax.xlane.f32.xlu0 %v1571
        %v1573 = vpop.xlane.xlu0 %1572
        %v1574 = vsel %vm685, %v1562, -inf
        %1575 = vmax.xlane.f32.xlu0 %v1574
        %v1576 = vpop.xlane.xlu0 %1575
        %v1577 = vsel %vm685, %v1563, -inf
        %1578 = vmax.xlane.f32.xlu0 %v1577
        %v1579 = vpop.xlane.xlu0 %1578
        %v1580 = vsel %vm685, %v1564, -inf
        %1581 = vmax.xlane.f32.xlu0 %v1580
        %v1582 = vpop.xlane.xlu0 %1581
        %v1583 = vsel %vm685, %v1565, -inf
        %1584 = vmax.xlane.f32.xlu0 %v1583
        %v1585 = vpop.xlane.xlu0 %1584
        %v1586 = vsel %vm685, %v1566, -inf
        %1587 = vmax.xlane.f32.xlu0 %v1586
        %v1588 = vpop.xlane.xlu0 %1587
        %v1589 = vsel %vm685, %v1567, -inf
        %1590 = vmax.xlane.f32.xlu0 %v1589
        %v1591 = vpop.xlane.xlu0 %1590
        %v1592 = vsub.f32 %v1560, %v1570
        %v1593 = vsub.f32 %v1561, %v1573
        %v1594 = vsub.f32 %v1562, %v1576
        %v1595 = vsub.f32 %v1563, %v1579
        %v1596 = vsub.f32 %v1564, %v1582
        %v1597 = vsub.f32 %v1565, %v1585
        %v1598 = vsub.f32 %v1566, %v1588
        %v1599 = vsub.f32 %v1567, %v1591
        %v1600 = vmul.f32 %v1592, 1.442695
        %v1601 = vpow.pop %v1600
        %v1602 = vmul.f32 %v1593, 1.442695
        %v1603 = vpow.pop %v1602
        %v1604 = vmul.f32 %v1594, 1.442695
        %v1605 = vpow.pop %v1604
        %v1606 = vmul.f32 %v1595, 1.442695
        %v1607 = vpow.pop %v1606
        %v1608 = vmul.f32 %v1596, 1.442695
        %v1609 = vpow.pop %v1608
        %v1610 = vmul.f32 %v1597, 1.442695
        %v1611 = vpow.pop %v1610
        %v1612 = vmul.f32 %v1598, 1.442695
        %v1613 = vpow.pop %v1612
        %v1614 = vmul.f32 %v1599, 1.442695
        %v1615 = vpow.pop %v1614
        %v1616 = vsel %vm685, %v1601, 0.0
        %1617 = vadd.xlane.f32.xlu0 %v1616
        %v1618 = vpop.xlane.xlu0 %1617
        %v1619 = vsel %vm685, %v1603, 0.0
        %1620 = vadd.xlane.f32.xlu0 %v1619
        %v1621 = vpop.xlane.xlu0 %1620
        %v1622 = vsel %vm685, %v1605, 0.0
        %1623 = vadd.xlane.f32.xlu0 %v1622
        %v1624 = vpop.xlane.xlu0 %1623
        %v1625 = vsel %vm685, %v1607, 0.0
        %1626 = vadd.xlane.f32.xlu0 %v1625
        %v1627 = vpop.xlane.xlu0 %1626
        %v1628 = vsel %vm685, %v1609, 0.0
        %1629 = vadd.xlane.f32.xlu0 %v1628
        %v1630 = vpop.xlane.xlu0 %1629
        %v1631 = vsel %vm685, %v1611, 0.0
        %1632 = vadd.xlane.f32.xlu0 %v1631
        %v1633 = vpop.xlane.xlu0 %1632
        %v1634 = vsel %vm685, %v1613, 0.0
        %1635 = vadd.xlane.f32.xlu0 %v1634
        %v1636 = vpop.xlane.xlu0 %1635
        %v1637 = vsel %vm685, %v1615, 0.0
        %1638 = vadd.xlane.f32.xlu0 %v1637
        %v1639 = vpop.xlane.xlu0 %1638
        %v1640 = vrcp.pop %v1618
        %v1641 = vrcp.pop %v1621
        %v1642 = vrcp.pop %v1624
        %v1643 = vrcp.pop %v1627
        %v1644 = vrcp.pop %v1630
        %v1645 = vrcp.pop %v1633
        %v1646 = vrcp.pop %v1636
        %v1647 = vrcp.pop %v1639
        %v1648 = vpack.c.bf16 %v1603, %v1601
        %v1649 = vpack.c.bf16 %v1607, %v1605
        %v1650 = vpack.c.bf16 %v1611, %v1609
        %v1651 = vpack.c.bf16 %v1615, %v1613
        %1652 = vrot.lane.b32.xlu0 %v558, 32
        %v1653 = vpop.permute.xlu0 %1652
        %1654 = vrot.lane.b32.xlu0 %v561, 32
        %v1655 = vpop.permute.xlu0 %1654
        %1656 = vrot.lane.b32.xlu0 %v564, 32
        %v1657 = vpop.permute.xlu0 %1656
        %1658 = vrot.lane.b32.xlu0 %v567, 32
        %v1659 = vpop.permute.xlu0 %1658
        %v1665 = vsel %vm685, %v1648, 0
        %v1668 = vsel %vm685, %v1649, 0
        %v1671 = vsel %vm685, %v1650, 0
        %v1674 = vsel %vm685, %v1651, 0
        %1676 = vmatprep.subr.bf16.mxu0 0
        %1677 = vmatpush1.bf16.msra.mxu0 0
        %1678 = vmatprep.subr.bf16.mxu0 0
        %1679 = vmatpush1.bf16.msra.mxu0 0
        %1680 = vmatprep.subr.bf16.mxu0 0
        %1681 = vmatpush1.bf16.msra.mxu0 0
        %1682 = vmatprep.subr.bf16.mxu0 0
        %1683 = vmatpush1.bf16.msra.mxu0 0
        %1684 = vmatprep.subr.bf16.mxu0 0
        %1685 = vmatpush1.bf16.msra.mxu0 %v1659
        %1686 = vmatprep.subr.bf16.mxu0 0
        %1687 = vmatpush1.bf16.msra.mxu0 %v1657
        %1688 = vmatprep.subr.bf16.mxu0 0
        %1689 = vmatpush1.bf16.msra.mxu0 %v1655
        %1690 = vmatprep.subr.bf16.mxu0 0
        %1691 = vmatpush1.bf16.msra.mxu0 %v1653
        %1692 = vmatprep.subr.bf16.mxu0 0
        %1693 = vmatpush2.bf16.msra.mxu0 0
        %1694 = vmatprep.subr.bf16.mxu0 0
        %1695 = vmatpush2.bf16.msra.mxu0 0
        %1696 = vmatprep.subr.bf16.mxu0 0
        %1697 = vmatpush2.bf16.msra.mxu0 0
        %1698 = vmatprep.subr.bf16.mxu0 0
        %1699 = vmatpush2.bf16.msra.mxu0 0
        %1700 = vmatprep.subr.bf16.mxu0 0
        %1701 = vmatpush2.bf16.msra.mxu0 0
        %1702 = vmatprep.subr.bf16.mxu0 0
        %1703 = vmatpush2.bf16.msra.mxu0 0
        %1704 = vmatprep.subr.bf16.mxu0 0
        %1705 = vmatpush2.bf16.msra.mxu0 0
        %1706 = vmatprep.subr.bf16.mxu0 0
        %1707 = vmatpush2.bf16.msra.mxu0 0
        %1708 = vmatprep.mubr.bf16.mxu0 0
        %1709 = vmatmul.mubr.bf16.gmra.mxu0 %v1665
        %v1710 = vpop.f32.mrf.mxu0
        %v1711 = vadd.f32 0.0, %v1710
        %v1712 = vpop.f32.mrf.mxu0
        %v1713 = vpop.f32.mrf.mxu0
        %v1714 = vadd.f32 0.0, %v1713
        %v1715 = vpop.f32.mrf.mxu0
        %1716 = vmatprep.mubr.bf16.mxu0 0
        %1717 = vmatmul.mubr.bf16.gmra.mxu0 %v1668
        %v1718 = vpop.f32.mrf.mxu0
        %v1719 = vadd.f32 0.0, %v1718
        %v1720 = vpop.f32.mrf.mxu0
        %v1721 = vpop.f32.mrf.mxu0
        %v1722 = vadd.f32 0.0, %v1721
        %v1723 = vpop.f32.mrf.mxu0
        %1724 = vmatprep.mubr.bf16.mxu0 0
        %1725 = vmatmul.mubr.bf16.gmra.mxu0 %v1671
        %v1726 = vpop.f32.mrf.mxu0
        %v1727 = vadd.f32 0.0, %v1726
        %v1728 = vpop.f32.mrf.mxu0
        %v1729 = vpop.f32.mrf.mxu0
        %v1730 = vadd.f32 0.0, %v1729
        %v1731 = vpop.f32.mrf.mxu0
        %1732 = vmatprep.mubr.bf16.mxu0 0
        %1733 = vmatmul.mubr.bf16.gmra.mxu0 %v1674
        %v1734 = vpop.f32.mrf.mxu0
        %v1735 = vadd.f32 0.0, %v1734
        %v1736 = vpop.f32.mrf.mxu0
        %v1737 = vpop.f32.mrf.mxu0
        %v1738 = vadd.f32 0.0, %v1737
        %v1739 = vpop.f32.mrf.mxu0
        %1740 = vdwg.mxu0
        %v1741 = vmul.f32 %v1711, %v1640
        %v1742 = vmul.f32 %v1714, %v1641
        %v1743 = vmul.f32 %v1719, %v1642
        %v1744 = vmul.f32 %v1722, %v1643
        %v1745 = vmul.f32 %v1727, %v1644
        %v1746 = vmul.f32 %v1730, %v1645
        %v1747 = vmul.f32 %v1735, %v1646
        %v1748 = vmul.f32 %v1738, %v1647
        %1757 = vrot.lane.b32.xlu0 %v1153, 32
        %v1758 = vpop.permute.xlu0 %1757
        %1759 = vrot.lane.b32.xlu0 %v1154, 32
        %v1760 = vpop.permute.xlu0 %1759
        %1761 = vrot.lane.b32.xlu0 %v1155, 32
        %v1762 = vpop.permute.xlu0 %1761
        %1763 = vrot.lane.b32.xlu0 %v1156, 32
        %v1764 = vpop.permute.xlu0 %1763
        %1765 = vrot.lane.b32.xlu0 %v1157, 32
        %v1766 = vpop.permute.xlu0 %1765
        %1767 = vrot.lane.b32.xlu0 %v1158, 32
        %v1768 = vpop.permute.xlu0 %1767
        %1769 = vrot.lane.b32.xlu0 %v1159, 32
        %v1770 = vpop.permute.xlu0 %1769
        %1771 = vrot.lane.b32.xlu0 %v1160, 32
        %v1772 = vpop.permute.xlu0 %1771
        %1789 = vrot.lane.b32.xlu0 %v1447, 64
        %v1790 = vpop.permute.xlu0 %1789
        %1791 = vrot.lane.b32.xlu0 %v1448, 64
        %v1792 = vpop.permute.xlu0 %1791
        %1793 = vrot.lane.b32.xlu0 %v1449, 64
        %v1794 = vpop.permute.xlu0 %1793
        %1795 = vrot.lane.b32.xlu0 %v1450, 64
        %v1796 = vpop.permute.xlu0 %1795
        %1797 = vrot.lane.b32.xlu0 %v1451, 64
        %v1798 = vpop.permute.xlu0 %1797
        %1799 = vrot.lane.b32.xlu0 %v1452, 64
        %v1800 = vpop.permute.xlu0 %1799
        %1801 = vrot.lane.b32.xlu0 %v1453, 64
        %v1802 = vpop.permute.xlu0 %1801
        %1803 = vrot.lane.b32.xlu0 %v1454, 64
        %v1804 = vpop.permute.xlu0 %1803
        %1821 = vrot.lane.b32.xlu0 %v1741, 96
        %v1822 = vpop.permute.xlu0 %1821
        %1823 = vrot.lane.b32.xlu0 %v1742, 96
        %v1824 = vpop.permute.xlu0 %1823
        %1825 = vrot.lane.b32.xlu0 %v1743, 96
        %v1826 = vpop.permute.xlu0 %1825
        %1827 = vrot.lane.b32.xlu0 %v1744, 96
        %v1828 = vpop.permute.xlu0 %1827
        %1829 = vrot.lane.b32.xlu0 %v1745, 96
        %v1830 = vpop.permute.xlu0 %1829
        %1831 = vrot.lane.b32.xlu0 %v1746, 96
        %v1832 = vpop.permute.xlu0 %1831
        %1833 = vrot.lane.b32.xlu0 %v1747, 96
        %v1834 = vpop.permute.xlu0 %1833
        %1835 = vrot.lane.b32.xlu0 %v1748, 96
        %v1836 = vpop.permute.xlu0 %1835
        %v1845 = vsel %vm587, %v847, %v1758
        %v1846 = vsel %vm587, %v848, %v1760
        %v1847 = vsel %vm587, %v849, %v1762
        %v1848 = vsel %vm587, %v850, %v1764
        %v1849 = vsel %vm587, %v851, %v1766
        %v1850 = vsel %vm587, %v852, %v1768
        %v1851 = vsel %vm587, %v853, %v1770
        %v1852 = vsel %vm587, %v854, %v1772
        %v1853 = vsel %vm685, %v1845, %v1790
        %v1854 = vsel %vm685, %v1846, %v1792
        %v1855 = vsel %vm685, %v1847, %v1794
        %v1856 = vsel %vm685, %v1848, %v1796
        %v1857 = vsel %vm685, %v1849, %v1798
        %v1858 = vsel %vm685, %v1850, %v1800
        %v1859 = vsel %vm685, %v1851, %v1802
        %v1860 = vsel %vm685, %v1852, %v1804
        %vm1861 = vcmask 785408
        %v1862 = vsel %vm1861, %v1853, %v1822
        %v1863 = vsel %vm1861, %v1854, %v1824
        %v1864 = vsel %vm1861, %v1855, %v1826
        %v1865 = vsel %vm1861, %v1856, %v1828
        %v1866 = vsel %vm1861, %v1857, %v1830
        %v1867 = vsel %vm1861, %v1858, %v1832
        %v1868 = vsel %vm1861, %v1859, %v1834
        %v1869 = vsel %vm1861, %v1860, %v1836
        %v1870 = vpack.c.bf16 %v1863, %v1862
        %v1871 = vpack.c.bf16 %v1865, %v1864
        %v1872 = vpack.c.bf16 %v1867, %v1866
        %v1873 = vpack.c.bf16 %v1869, %v1868
        %v1874 = vld [vmem:[#allocation7] sm:$0xf]
        %v1875 = vld [vmem:[#allocation7 + $0x4] sm:$0xf]
        %v1876 = vld [vmem:[#allocation7 + $0x8] sm:$0xf]
        %v1877 = vld [vmem:[#allocation7 + $0xc] sm:$0xf]
        %v1878 = vld [vmem:[#allocation7 + $0x10] sm:$0xf]
        %v1879 = vld [vmem:[#allocation7 + $0x14] sm:$0xf]
        %v1880 = vld [vmem:[#allocation7 + $0x18] sm:$0xf]
        %v1881 = vld [vmem:[#allocation7 + $0x1c] sm:$0xf]
        %v1882 = vld [vmem:[#allocation7 + $0x20] sm:$0xf]
        %v1883 = vld [vmem:[#allocation7 + $0x24] sm:$0xf]
        %v1884 = vld [vmem:[#allocation7 + $0x28] sm:$0xf]
        %v1885 = vld [vmem:[#allocation7 + $0x2c] sm:$0xf]
        %v1886 = vld [vmem:[#allocation7 + $0x30] sm:$0xf]
        %v1887 = vld [vmem:[#allocation7 + $0x34] sm:$0xf]
        %v1888 = vld [vmem:[#allocation7 + $0x38] sm:$0xf]
        %v1889 = vld [vmem:[#allocation7 + $0x3c] sm:$0xf]
        %v1890 = vld [vmem:[%s3] sm:$0x1]
        %v1892 = vlaneseq
        %v1893 = vshrl.u32 %v1892, 7
        %v1894 = vsub.s32 0, %v1893
        %v1895 = vrot.slane %v1890, %v1894
        %v1913 = vunpack.c.l.b16 %v1874
        %v1914 = vunpack.c.l.b16 %v1875
        %v1915 = vunpack.c.l.b16 %v1876
        %v1916 = vunpack.c.l.b16 %v1877
        %v1917 = vunpack.c.l.b16 %v1878
        %v1918 = vunpack.c.l.b16 %v1879
        %v1919 = vunpack.c.l.b16 %v1880
        %v1920 = vunpack.c.l.b16 %v1881
        %v1921 = vunpack.c.l.b16 %v1882
        %v1922 = vunpack.c.l.b16 %v1883
        %v1923 = vunpack.c.l.b16 %v1884
        %v1924 = vunpack.c.l.b16 %v1885
        %v1925 = vunpack.c.l.b16 %v1886
        %v1926 = vunpack.c.l.b16 %v1887
        %v1927 = vunpack.c.l.b16 %v1888
        %v1928 = vunpack.c.l.b16 %v1889
        %v1929 = vpack.c.b16 %v1914, %v1913
        %v1930 = vpack.c.b16 %v1916, %v1915
        %v1931 = vpack.c.b16 %v1918, %v1917
        %v1932 = vpack.c.b16 %v1920, %v1919
        %v1933 = vpack.c.b16 %v1922, %v1921
        %v1934 = vpack.c.b16 %v1924, %v1923
        %v1935 = vpack.c.b16 %v1926, %v1925
        %v1936 = vpack.c.b16 %v1928, %v1927
        %1945 = vmatprep.subr.bf16.mxu0 0
        %1946 = vmatpush1.bf16.msra.mxu0 %v1936
        %1947 = vmatprep.subr.bf16.mxu0 0
        %1948 = vmatpush1.bf16.msra.mxu0 %v1935
        %1949 = vmatprep.subr.bf16.mxu0 0
        %1950 = vmatpush1.bf16.msra.mxu0 %v1934
        %1951 = vmatprep.subr.bf16.mxu0 0
        %1952 = vmatpush1.bf16.msra.mxu0 %v1933
        %1953 = vmatprep.subr.bf16.mxu0 0
        %1954 = vmatpush1.bf16.msra.mxu0 %v1932
        %1955 = vmatprep.subr.bf16.mxu0 0
        %1956 = vmatpush1.bf16.msra.mxu0 %v1931
        %1957 = vmatprep.subr.bf16.mxu0 0
        %1958 = vmatpush1.bf16.msra.mxu0 %v1930
        %1959 = vmatprep.subr.bf16.mxu0 0
        %1960 = vmatpush1.bf16.msra.mxu0 %v1929
        %1961 = vmatprep.subr.bf16.mxu0 0
        %1962 = vmatpush2.bf16.msra.mxu0 0
        %1963 = vmatprep.subr.bf16.mxu0 0
        %1964 = vmatpush2.bf16.msra.mxu0 0
        %1965 = vmatprep.subr.bf16.mxu0 0
        %1966 = vmatpush2.bf16.msra.mxu0 0
        %1967 = vmatprep.subr.bf16.mxu0 0
        %1968 = vmatpush2.bf16.msra.mxu0 0
        %1969 = vmatprep.subr.bf16.mxu0 0
        %1970 = vmatpush2.bf16.msra.mxu0 0
        %1971 = vmatprep.subr.bf16.mxu0 0
        %1972 = vmatpush2.bf16.msra.mxu0 0
        %1973 = vmatprep.subr.bf16.mxu0 0
        %1974 = vmatpush2.bf16.msra.mxu0 0
        %1975 = vmatprep.subr.bf16.mxu0 0
        %1976 = vmatpush2.bf16.msra.mxu0 0
        %1977 = vmatprep.mubr.bf16.mxu0 0
        %1978 = vmatmul.mubr.bf16.gmra.mxu0 %v1870
        %v1979 = vpop.f32.mrf.mxu0
        %v1980 = vadd.f32 %v1895, %v1979
        %v1981 = vpop.f32.mrf.mxu0
        %v1982 = vpop.f32.mrf.mxu0
        %v1983 = vadd.f32 %v1895, %v1982
        %v1984 = vpop.f32.mrf.mxu0
        %1985 = vmatprep.mubr.bf16.mxu0 0
        %1986 = vmatmul.mubr.bf16.gmra.mxu0 %v1871
        %v1987 = vpop.f32.mrf.mxu0
        %v1988 = vadd.f32 %v1895, %v1987
        %v1989 = vpop.f32.mrf.mxu0
        %v1990 = vpop.f32.mrf.mxu0
        %v1991 = vadd.f32 %v1895, %v1990
        %v1992 = vpop.f32.mrf.mxu0
        %1993 = vmatprep.mubr.bf16.mxu0 0
        %1994 = vmatmul.mubr.bf16.gmra.mxu0 %v1872
        %v1995 = vpop.f32.mrf.mxu0
        %v1996 = vadd.f32 %v1895, %v1995
        %v1997 = vpop.f32.mrf.mxu0
        %v1998 = vpop.f32.mrf.mxu0
        %v1999 = vadd.f32 %v1895, %v1998
        %v2000 = vpop.f32.mrf.mxu0
        %2001 = vmatprep.mubr.bf16.mxu0 0
        %2002 = vmatmul.mubr.bf16.gmra.mxu0 %v1873
        %v2003 = vpop.f32.mrf.mxu0
        %v2004 = vadd.f32 %v1895, %v2003
        %v2005 = vpop.f32.mrf.mxu0
        %v2006 = vpop.f32.mrf.mxu0
        %v2007 = vadd.f32 %v1895, %v2006
        %v2008 = vpop.f32.mrf.mxu0
        %2009 = vdwg.mxu0
        %2010 = vst [vmem:[%s244] sm:$0xff] %v1980
        %2011 = vst [vmem:[%s244 + $0x8] sm:$0xff] %v1983
        %2012 = vst [vmem:[%s244 + $0x10] sm:$0xff] %v1988
        %2013 = vst [vmem:[%s244 + $0x18] sm:$0xff] %v1991
        %2014 = vst [vmem:[%s244 + $0x20] sm:$0xff] %v1996
        %2015 = vst [vmem:[%s244 + $0x28] sm:$0xff] %v1999
        %2016 = vst [vmem:[%s244 + $0x30] sm:$0xff] %v2004
        %2017 = vst [vmem:[%s244 + $0x38] sm:$0xff] %v2007
        %s2018 = sand.u32 %s119, 1
        %s2019 = scalar_lea.sflag [#allocation4], %s2018
        %s2020 = sand.u32 %s119, 1
        %s2021 = smul.addr %s2020, 64
        %s2022 = scalar_lea.vmem [#allocation8], %s2021
        // Predicated region
        $region49: #{tpu_custom_call.1} parent=35 // pred_check
          %p2023 = pneg %p129
        $region50: #{tpu_custom_call.1} parent=35 // pred_check_branch
          %2025 = sbr.rel (%p2023) target = $region52
        $region51: #{tpu_custom_call.1} parent=35 // pred_region
          %s2027 = ssub.s32 1024, 1024
          %2028 = vsyncadd %s2019, %s2027
          %s2029 = smul.addr %s22, 8
          %s2030 = smul.addr %s2029, 128
          %s2031 = scalar_lea.hbm %s4, %s2030
          %s2032 = sshll.u32 %s2022, 4
          %s2033 = int_to_ptr.vmem [resolvable:$true] %s2032
          %2038 = dma.vmem_to_hbm [thread:$0]  %s2033, 1024, %s2031, %s2019, 128, 128, 8
        $region52: #{tpu_custom_call.1} parent=35 // pred_fallthru
          _
      $region36: #{tpu_custom_call.1} parent=5 // pred_fallthru
        _
      %p2039 = scmp.le.s32.totalorder 2, %s17
      // Predicated region
      $region53: #{tpu_custom_call.1} parent=5 // pred_check
        %p2040 = pneg %p2039
      $region54: #{tpu_custom_call.1} parent=5 // pred_check_branch
        %2042 = sbr.rel (%p2040) target = $region56
      $region55: #{tpu_custom_call.1} parent=5 // pred_region
        %s2043 = ssub.s32 %s17, 2
        // Predicated region
        $region57: #{tpu_custom_call.1} parent=55 // pred_check
          %p2044 = pneg %p135
        $region58: #{tpu_custom_call.1} parent=55 // pred_check_branch
          %2046 = sbr.rel (%p2044) target = $region60
        $region59: #{tpu_custom_call.1} parent=55 // pred_region
          %s2047 = sand.u32 %s120, 1
          %s2048 = scalar_lea.sflag [#allocation4], %s2047
          %s2049 = sand.u32 %s120, 1
          %s2050 = smul.addr %s2049, 64
          %s2051 = scalar_lea.vmem [#allocation8], %s2050
          %2052 = dma.done %s2048, 1024
        $region60: #{tpu_custom_call.1} parent=55 // pred_fallthru
          _
      $region56: #{tpu_custom_call.1} parent=5 // pred_fallthru
        _
    $region6: #{tpu_custom_call.1} parent=1 // loop_footer
      %s21 = sadd.s32 1, %s17
    $region7: #{tpu_custom_call.1} parent=1 // loop_footer_branch
      %16 = sbr.rel target = $region3
    $region8: #{tpu_custom_call.1} parent=1 // loop_exit
      _
    %2053 = vsyncpa [#allocation3], 1
    %s2054 = scalar_lea.sflag [#allocation3], 1
    %2055 = vsyncpa %s2054, 1
    %2056 = vsyncpa [#allocation6], 1
    %2057 = vsyncpa [#allocation4], 1
    %s2058 = scalar_lea.sflag [#allocation4], 1
    %2059 = vsyncpa %s2058, 1

</llo_original>
